<compile_context>
chip_gen: v7x
topology: tpu7x:2x2x1
jax: 0.10.0
libtpu: 0.0.40
codegen_flags: <defaults>
</compile_context>

<pallas_src>
import functools

import jax
import jax.numpy as jnp
from jax.experimental import pallas as pl
from jax.experimental.pallas import tpu as pltpu


# ------------------------------ kernels ------------------------------

def _ps1d_strided_kernel(x_ref, o_ref, *, factor):
    """Primary kernel: per-phase strided lane stores into the dense output.

    x_ref: (tb, factor*c, L)   o_ref: (tb, c, L*factor)
    o[:, cc, j*factor + f] = x[:, f*c + cc, j]
    """
    c = o_ref.shape[1]
    L = x_ref.shape[2]
    for f in range(factor):  # factor is a small static int
        o_ref[:, :, pl.ds(f, L, stride=factor)] = x_ref[:, f * c:(f + 1) * c, :]


def _ps1d_stack_kernel(x_ref, o_ref, *, factor):
    """Fallback kernel (known to lower): in-register stack + minor merge,
    single dense store.  Same lane-dense out_spec, just more in-register
    relayout work than the strided-store path."""
    tb, c, lf = o_ref.shape
    L = x_ref.shape[2]
    parts = [x_ref[:, f * c:(f + 1) * c, :] for f in range(factor)]
    y = jnp.stack(parts, axis=-1)              # (tb, c, L, factor)
    o_ref[...] = y.reshape(tb, c, lf)          # (L, factor) -> L*factor


# ------------------------------ tiling ------------------------------

@functools.lru_cache(maxsize=1)
def _vmem_capacity_bytes():
    try:
        info = pltpu.get_tpu_info()
        for attr in ("vmem_capacity_bytes", "vmem_bytes", "vmem_size_bytes"):
            v = getattr(info, attr, None)
            if v:
                return int(v)
    except Exception:
        pass
    return 64 << 20  # conservative default: v7x per-TensorCore VMEM


def _pallas_params(b, fc, c, L, factor, dtype):
    """Pick (tb, tl, grid, vmem_limit) for blocks (tb, fc, tl) -> (tb, c, tl*factor)."""
    itemsize = jnp.dtype(dtype).itemsize
    bytes_per_point = 2 * fc * itemsize            # in+out bytes per (batch, lane) point
    capacity = _vmem_capacity_bytes()
    # per-step in+out budget: ~16 MiB on 128 MiB VMEM (v5e/v6e), ~8 MiB on 64 MiB (v7x)
    target = max(2 << 20, min(16 << 20, capacity // 8))

    per_image = L * bytes_per_point
    if per_image <= target:
        tl = L                                     # whole flattened image per step
        tb = int(max(1, min(b, target // max(1, per_image))))
    else:
        tb = 1
        if L <= 128:
            tl = L
        else:
            cap_lanes = max(1, target // bytes_per_point)
            tl = int(min(L, max(128, (cap_lanes // 128) * 128)))  # 128-aligned lane tile

    # Guarantee >= 2 grid steps when splittable (v7x: 2 TensorCores; also gives
    # DMA/compute overlap).  Harmless on v5e/v6e.
    def _steps(tb_, tl_):
        return pl.cdiv(b, tb_) * pl.cdiv(L, tl_)

    if _steps(tb, tl) < 2:
        if b >= 2:
            tb = pl.cdiv(b, 2)
        elif L >= 256:
            tl = int(max(128, ((L // 2) // 128) * 128))

    grid = (pl.cdiv(b, tb), pl.cdiv(L, tl))

    in_block = tb * fc * tl * itemsize
    out_block = tb * c * tl * factor * itemsize
    # double-buffered in/out blocks + in-kernel intermediates (stack fallback
    # materializes ~2 extra output-block-sized copies) + slack
    est = 2 * (in_block + out_block) + 2 * out_block + (2 << 20)
    vmem_limit = int(min(max(16 << 20, est), max(16 << 20, int(capacity * 0.75))))
    return tb, tl, grid, vmem_limit


# ------------------------------ pallas_call builder ------------------------------

def _ps1d_call(kernel_body, x3, c, factor, tb, tl, grid, vmem_limit):
    b, fc, L = x3.shape
    kernel = functools.partial(kernel_body, factor=factor)
    return pl.pallas_call(
        kernel,
        out_shape=jax.ShapeDtypeStruct((b, c, L * factor), x3.dtype),
        grid=grid,
        in_specs=[pl.BlockSpec((tb, fc, tl), lambda ib, il: (ib, 0, il))],
        out_specs=pl.BlockSpec((tb, c, tl * factor), lambda ib, il: (ib, 0, il)),
        compiler_params=pltpu.CompilerParams(
            dimension_semantics=("parallel", "parallel"),
            vmem_limit_bytes=vmem_limit),
    )(x3)


# One-time eager probe: does this jaxlib's Mosaic lower a strided lane store?
_STRIDED_OK = {}


def _strided_store_supported(dtype, factor):
    key = (jnp.dtype(dtype).name, int(factor))
    if key not in _STRIDED_OK:
        try:
            probe = jnp.zeros((1, factor, 256), dtype=dtype)   # fc=factor, c=1, L=256
            y = _ps1d_call(_ps1d_strided_kernel, probe, 1, factor,
                           tb=1, tl=256, grid=(1, 1), vmem_limit=16 << 20)
            jax.block_until_ready(y)
            _STRIDED_OK[key] = True
        except Exception:
            _STRIDED_OK[key] = False
    return _STRIDED_OK[key]


# ------------------------------ public wrapper ------------------------------

def pixel_shuffle_1d(x, factor):
    """Pallas implementation of PixelShuffle1D.forward (NCHW layout)."""
    b, fc, h, w = x.shape
    assert fc % factor == 0, "channel dim must be divisible by factor"
    c = fc // factor
    L = h * w

    x3 = x.reshape(b, fc, L)                       # free contiguous view
    tb, tl, grid, vmem_limit = _pallas_params(b, fc, c, L, factor, x.dtype)

    kernel_body = (_ps1d_strided_kernel
                   if _strided_store_supported(x.dtype, factor)
                   else _ps1d_stack_kernel)

    y3 = _ps1d_call(kernel_body, x3, c, factor, tb, tl, grid, vmem_limit)
    return y3.reshape(b, c, h, w * factor)         # free contiguous view


def pixel_shuffle_1d_ref(x, factor):
    """Pure-JAX reference mirroring the PyTorch view/permute/view exactly."""
    b, fc, h, w = x.shape
    c = fc // factor
    xr = x.reshape(b, factor, c, h, w)
    xr = jnp.transpose(xr, (0, 2, 3, 4, 1))
    return xr.reshape(b, c, h, w * factor)


if __name__ == "__main__":
    # PixelShuffle1D has no learnable parameters; only the upscale factor.
    key = jax.random.PRNGKey(0)

    # Main test: factor=2, x: [2, factor*4, 8, 16]
    factor = 2
    b, c, h, w = 2, 4, 8, 16
    x = jax.random.normal(key, (b, factor * c, h, w), dtype=jnp.float32)
    y = jax.block_until_ready(pixel_shuffle_1d(x, factor))
    y_ref = pixel_shuffle_1d_ref(x, factor)
    assert y.shape == (b, c, h, w * factor), y.shape
    assert y.dtype == x.dtype
    assert jnp.array_equal(y, y_ref), "Pallas output mismatch vs reference (factor=2)"

    # Secondary test: factor=3, odd-ish small shapes (exercises full-extent lane blocks).
    factor2 = 3
    x2 = jax.random.normal(jax.random.PRNGKey(1), (1, factor2 * 2, 4, 8),
                           dtype=jnp.float32)
    y2 = jax.block_until_ready(pixel_shuffle_1d(x2, factor2))
    assert jnp.array_equal(y2, pixel_shuffle_1d_ref(x2, factor2)), \
        "Pallas output mismatch vs reference (factor=3)"

    print("KERNEL_OK")
</pallas_src>

<mosaic_0001>
module attributes {stable_mosaic.version = 11 : i64} {
  func.func @_ps1d_strided_kernel(%arg0: i32, %arg1: i32, %arg2: memref<1x2x256xf32, #tpu.memory_space<vmem>>, %arg3: memref<1x1x512xf32, #tpu.memory_space<vmem>>) attributes {dimension_semantics = [#tpu.dimension_semantics<parallel>, #tpu.dimension_semantics<parallel>], iteration_bounds = array<i64: 1, 1>, scalar_prefetch = 0 : i64, scratch_operands = 0 : i64, tpu.core_type = #tpu.core_type<tc>, window_params = [{transform_indices = @transform_0, window_bounds = array<i64: 1, 2, 256>}, {transform_indices = @transform_1, window_bounds = array<i64: 1, 1, 512>}]} {
    %c0 = arith.constant 0 : index
    %c0_0 = arith.constant 0 : index
    %c0_1 = arith.constant 0 : index
    %0 = vector.load %arg2[%c0, %c0_0, %c0_1] : memref<1x2x256xf32, #tpu.memory_space<vmem>>, vector<1x1x256xf32>
    %c0_2 = arith.constant 0 : index
    %c0_3 = arith.constant 0 : index
    %c0_4 = arith.constant 0 : index
    %1 = tpu.strided_load %arg3[%c0_2, %c0_3, %c0_4] {strides = array<i32: 1, 1, 2>} : memref<1x1x512xf32, #tpu.memory_space<vmem>>, vector<1x1x256xf32>
    tpu.strided_store %arg3[%c0_2, %c0_3, %c0_4], %0 {strides = array<i32: 1, 1, 2>} : memref<1x1x512xf32, #tpu.memory_space<vmem>>, vector<1x1x256xf32>
    %c0_5 = arith.constant 0 : index
    %c1 = arith.constant 1 : index
    %c0_6 = arith.constant 0 : index
    %2 = vector.load %arg2[%c0_5, %c1, %c0_6] : memref<1x2x256xf32, #tpu.memory_space<vmem>>, vector<1x1x256xf32>
    %c0_7 = arith.constant 0 : index
    %c0_8 = arith.constant 0 : index
    %c1_9 = arith.constant 1 : index
    %3 = tpu.strided_load %arg3[%c0_7, %c0_8, %c1_9] {strides = array<i32: 1, 1, 2>} : memref<1x1x512xf32, #tpu.memory_space<vmem>>, vector<1x1x256xf32>
    tpu.strided_store %arg3[%c0_7, %c0_8, %c1_9], %2 {strides = array<i32: 1, 1, 2>} : memref<1x1x512xf32, #tpu.memory_space<vmem>>, vector<1x1x256xf32>
    return
  }
  func.func @transform_0(%arg0: i32, %arg1: i32) -> (i32, i32, i32) {
    %c0_i32 = arith.constant 0 : i32
    %c0_i32_0 = arith.constant 0 : i32
    return %arg0, %c0_i32, %arg1 : i32, i32, i32
  }
  func.func @transform_1(%arg0: i32, %arg1: i32) -> (i32, i32, i32) {
    %c0_i32 = arith.constant 0 : i32
    %c0_i32_0 = arith.constant 0 : i32
    return %arg0, %c0_i32, %arg1 : i32, i32, i32
  }
}

module attributes {stable_mosaic.version = 11 : i64} {
  func.func @_ps1d_stack_kernel(%arg0: i32, %arg1: i32, %arg2: memref<1x8x128xf32, #tpu.memory_space<vmem>>, %arg3: memref<1x4x256xf32, #tpu.memory_space<vmem>>) attributes {dimension_semantics = [#tpu.dimension_semantics<parallel>, #tpu.dimension_semantics<parallel>], iteration_bounds = array<i64: 2, 1>, scalar_prefetch = 0 : i64, scratch_operands = 0 : i64, tpu.core_type = #tpu.core_type<tc>, window_params = [{transform_indices = @transform_0, window_bounds = array<i64: 1, 8, 128>}, {transform_indices = @transform_1, window_bounds = array<i64: 1, 4, 256>}]} {
    %c0 = arith.constant 0 : index
    %c0_0 = arith.constant 0 : index
    %c0_1 = arith.constant 0 : index
    %0 = vector.load %arg2[%c0, %c0_0, %c0_1] : memref<1x8x128xf32, #tpu.memory_space<vmem>>, vector<1x4x128xf32>
    %c0_2 = arith.constant 0 : index
    %c4 = arith.constant 4 : index
    %c0_3 = arith.constant 0 : index
    %1 = vector.load %arg2[%c0_2, %c4, %c0_3] : memref<1x8x128xf32, #tpu.memory_space<vmem>>, vector<1x4x128xf32>
    %2 = vector.shape_cast %0 : vector<1x4x128xf32> to vector<1x4x128x1xf32>
    %3 = vector.shape_cast %1 : vector<1x4x128xf32> to vector<1x4x128x1xf32>
    %4 = tpu.concatenate %2, %3 in 3 : vector<1x4x128x1xf32>, vector<1x4x128x1xf32> -> vector<1x4x128x2xf32>
    %5 = vector.shape_cast %4 : vector<1x4x128x2xf32> to vector<1x4x256xf32>
    %c0_4 = arith.constant 0 : index
    %c0_5 = arith.constant 0 : index
    %c0_6 = arith.constant 0 : index
    %6 = vector.load %arg3[%c0_4, %c0_5, %c0_6] : memref<1x4x256xf32, #tpu.memory_space<vmem>>, vector<1x4x256xf32>
    tpu.vector_store %arg3[%c0_4, %c0_5, %c0_6], %5 {strides = array<i32>} : memref<1x4x256xf32, #tpu.memory_space<vmem>>, vector<1x4x256xf32>,
    return
  }
  func.func @transform_0(%arg0: i32, %arg1: i32) -> (i32, i32, i32) {
    %c0_i32 = arith.constant 0 : i32
    %c0_i32_0 = arith.constant 0 : i32
    return %arg0, %c0_i32, %arg1 : i32, i32, i32
  }
  func.func @transform_1(%arg0: i32, %arg1: i32) -> (i32, i32, i32) {
    %c0_i32 = arith.constant 0 : i32
    %c0_i32_0 = arith.constant 0 : i32
    return %arg0, %c0_i32, %arg1 : i32, i32, i32
  }
}

</mosaic_0001>

<llo_original>
// kernel: tpu_custom_call.1
$region0: #{tpu_custom_call.1}
  #allocation0 [shape = 'u32[]', space=smem, size = 0x4, offset = 0x4, fixed_abs, tag = 'smem constant byte address 0x4 - core index']
  #allocation1 [shape = 'u32[144,128]{1,0:T(1,128)}', space=vmem, size = 0x12000, scoped, tag = 'internal scratch']
  %s0 = inlined_call_operand.hbm [shape: f32[2,8,128], index: 0, kind: input, shape index: {}]
  %s1 = inlined_call_operand.hbm [shape: f32[2,4,256], index: 1, kind: output, shape index: {}]
  %s2 = sld [smem:[#allocation0]]
  $region41: #{tpu_custom_call.1} parent=0
    _
  %s4 = ssub.s32 1, %s2
  %s5 = scalar_select 0, %s4, %s2
  $region1: #{tpu_custom_call.1} parent=0
    #allocation2 [shape = 'u8[8192]{0}', space=vmem, size = 0x2000, scoped, tag = 'input window, operand 0']
    #allocation3 [shape = 's32[2]{0}', space=sflag, size = 0x8, scoped, tag = 'scoped memory for tpu_custom_call.1']
    #allocation4 [shape = 's32[2]{0}', space=sflag, size = 0x8, scoped, tag = 'scoped memory for tpu_custom_call.1']
    #allocation5 [shape = 'u8[8192]{0}', space=vmem, size = 0x2000, scoped, tag = 'output window, operand 0']
    %6 = vsyncpa [#allocation3], 0
    %s7 = scalar_lea.sflag [#allocation3], 1
    %8 = vsyncpa %s7, 0
    %9 = vsyncpa [#allocation4], 0
    %s10 = scalar_lea.sflag [#allocation4], 1
    %11 = vsyncpa %s10, 0
    loop: start=0, step=1, limit=4
    $region2: #{tpu_custom_call.1} parent=1 // loop_pre_header
      _
    $region3: #{tpu_custom_call.1} parent=1 // loop_header
      %s13 = sphi 0, %s17
      %p14 = scmp.ge.s32.totalorder %s13, 4
      %s20 = sphi 0, %s32
      %s21 = sphi 0, %s28
      %s22 = sphi 0, %s20
      %s23 = sphi 0, %s21
      %s24 = sphi 0, %s22
      %s25 = sphi 0, %s23
      %s37 = sphi 0, %s39
      %s40 = sphi 0, %s37
      %s41 = sphi 0, %s40
      %s57 = sphi 0, %s41
      %s65 = sphi 0, %s67
      %s68 = sphi 0, %s65
      %s69 = sphi 0, %s68
      %s85 = sphi 0, %s69
    $region4: #{tpu_custom_call.1} parent=1 // loop_header_branch
      %16 = sbr.rel (%p14) target = $region8
    $region5: #{tpu_custom_call.1} parent=1 // loop_body
      %s18 = ssub.s32 %s13, 1
      %s19 = ssub.s32 %s13, 2
      %s26 = sadd.s32 1, %s21
      %p27 = scmp.ge.s32.totalorder %s26, 1
      %s28 = scalar_select %p27, 0, %s26
      %s29 = sadd.s32 1, %s20
      %s30 = scalar_select %p27, %s29, %s20
      %p31 = scmp.ge.s32.totalorder %s30, 2
      %s32 = scalar_select %p31, 0, %s30
      %s33 = ssub.s32 %s20, %s32
      %s34 = ssub.s32 %s21, %s28
      %s35 = sor.u32 %s33, %s34
      %p36 = scmp.eq.s32.totalorder %s35, 0
      %s38 = sadd.s32 %s37, 1
      %s39 = scalar_select %p36, %s37, %s38
      %p42 = pneg %p36
      %p43 = scmp.eq.s32.totalorder %s13, 1
      %p44 = por %p42, %p43
      %p45 = scmp.ne.s32.totalorder %s37, %s40
      %p46 = scmp.eq.s32.totalorder %s13, 0
      %p47 = por %p45, %p46
      %p48 = scmp.ne.s32.totalorder %s37, %s40
      %p49 = scmp.eq.s32.totalorder %s18, 1
      %p50 = por %p48, %p49
      %p51 = scmp.ne.s32.totalorder %s40, %s41
      %p52 = scmp.eq.s32.totalorder %s18, 0
      %p53 = por %p51, %p52
      %p54 = scmp.ne.s32.totalorder %s40, %s41
      %p55 = scmp.eq.s32.totalorder %s19, 1
      %p56 = por %p54, %p55
      %p58 = scmp.ne.s32.totalorder %s41, %s57
      %p59 = scmp.eq.s32.totalorder %s19, 0
      %p60 = por %p58, %p59
      %s61 = ssub.s32 %s20, %s32
      %s62 = ssub.s32 %s21, %s28
      %s63 = sor.u32 %s61, %s62
      %p64 = scmp.eq.s32.totalorder %s63, 0
      %s66 = sadd.s32 %s65, 1
      %s67 = scalar_select %p64, %s65, %s66
      %p70 = pneg %p64
      %p71 = scmp.eq.s32.totalorder %s13, 1
      %p72 = por %p70, %p71
      %p73 = scmp.ne.s32.totalorder %s65, %s68
      %p74 = scmp.eq.s32.totalorder %s13, 0
      %p75 = por %p73, %p74
      %p76 = scmp.ne.s32.totalorder %s65, %s68
      %p77 = scmp.eq.s32.totalorder %s18, 1
      %p78 = por %p76, %p77
      %p79 = scmp.ne.s32.totalorder %s68, %s69
      %p80 = scmp.eq.s32.totalorder %s18, 0
      %p81 = por %p79, %p80
      %p82 = scmp.ne.s32.totalorder %s68, %s69
      %p83 = scmp.eq.s32.totalorder %s19, 1
      %p84 = por %p82, %p83
      %p86 = scmp.ne.s32.totalorder %s69, %s85
      %p87 = scmp.eq.s32.totalorder %s19, 0
      %p88 = por %p86, %p87
      %p89 = scmp.le.s32.totalorder 1, %s13
      %p90 = scmp.lt.s32.totalorder %s13, 3
      %p91 = pnand %p89, %p90
      %p92 = pneg %p91
      // Predicated region
      $region9: #{tpu_custom_call.1} parent=5 // pred_check
        _
      $region10: #{tpu_custom_call.1} parent=5 // pred_check_branch
        %94 = sbr.rel (%p91) target = $region12
      $region11: #{tpu_custom_call.1} parent=5 // pred_region
        %s95 = ssub.s32 %s13, 1
      $region12: #{tpu_custom_call.1} parent=5 // pred_fallthru
        _
      %p96 = scmp.lt.s32.totalorder %s13, 2
      // Predicated region
      $region13: #{tpu_custom_call.1} parent=5 // pred_check
        %p97 = pneg %p96
      $region14: #{tpu_custom_call.1} parent=5 // pred_check_branch
        %99 = sbr.rel (%p97) target = $region16
      $region15: #{tpu_custom_call.1} parent=5 // pred_region
        // Predicated region
        $region17: #{tpu_custom_call.1} parent=15 // pred_check
          %p100 = pneg %p47
        $region18: #{tpu_custom_call.1} parent=15 // pred_check_branch
          %102 = sbr.rel (%p100) target = $region20
        $region19: #{tpu_custom_call.1} parent=15 // pred_region
          %s103 = sand.u32 %s37, 1
          %s104 = scalar_lea.sflag [#allocation3], %s103
          %s105 = sand.u32 %s37, 1
          %s106 = smul.addr %s105, 8
          %s107 = scalar_lea.vmem [#allocation2], %s106
          %s109 = ssub.s32 128, 128
          %110 = vsyncadd %s104, %s109
          %s111 = sadd.s32 %s21, %s20
          %s112 = smul.addr %s111, 128
          %s113 = scalar_lea.hbm %s0, %s112
          %s115 = sshll.u32 %s107, 4
          %s116 = int_to_ptr.vmem [resolvable:$true] %s115
          %118 = dma.hbm_to_vmem [thread:$0]  %s113, 128, %s116, %s104
        $region20: #{tpu_custom_call.1} parent=15 // pred_fallthru
          _
      $region16: #{tpu_custom_call.1} parent=5 // pred_fallthru
        _
      %p119 = scmp.le.s32.totalorder 1, %s13
      %p120 = scmp.lt.s32.totalorder %s13, 3
      %p121 = pnand %p119, %p120
      %p122 = pneg %p121
      // Predicated region
      $region21: #{tpu_custom_call.1} parent=5 // pred_check
        _
      $region22: #{tpu_custom_call.1} parent=5 // pred_check_branch
        %124 = sbr.rel (%p121) target = $region24
      $region23: #{tpu_custom_call.1} parent=5 // pred_region
        %s125 = ssub.s32 %s13, 1
        %s126 = sand.u32 %s40, 1
        %s127 = scalar_lea.sflag [#allocation3], %s126
        %s128 = sand.u32 %s40, 1
        %s129 = smul.addr %s128, 8
        %s130 = scalar_lea.vmem [#allocation2], %s129
        // Predicated region
        $region25: #{tpu_custom_call.1} parent=23 // pred_check
          %p131 = pneg %p53
        $region26: #{tpu_custom_call.1} parent=23 // pred_check_branch
          %133 = sbr.rel (%p131) target = $region28
        $region27: #{tpu_custom_call.1} parent=23 // pred_region
          %134 = dma.done %s127, 128
        $region28: #{tpu_custom_call.1} parent=23 // pred_fallthru
          _
        %s135 = sand.u32 %s40, 1
        %s136 = scalar_lea.sflag [#allocation3], %s135
        %s137 = sand.u32 %s40, 1
        %s138 = smul.addr %s137, 8
        %s139 = scalar_lea.vmem [#allocation2], %s138
        %p140 = pneg %p53
        %p141 = pneg %p50
        %p142 = pneg %p81
        %p143 = pneg %p78
        %s144 = sand.u32 %s68, 1
        %s145 = scalar_lea.sflag [#allocation4], %s144
        %s146 = sand.u32 %s68, 1
        %s147 = smul.addr %s146, 8
        %s148 = scalar_lea.vmem [#allocation5], %s147
        %s149 = smul.u32 2, %s23
        %v150 = vld [vmem:[%s130] sm:$0xf]
        %v151 = vld [vmem:[%s130 + $0x4] sm:$0xf]
        %v152 = vlaneseq
        %v153 = vshrl.u32 %v152, 7
        %v154 = vsub.s32 0, %v153
        %v155 = vrot.slane %v150, %v154
        %157 = vbcast.lane.b32.xlu0 %v155, 256
        %v158 = vpop.permute.xlu0 %157
        %s160 = sor.u32 256, 8
        %161 = vbcast.lane.b32.xlu0 %v155, %s160
        %v162 = vpop.permute.xlu0 %161
        %s164 = sor.u32 256, 16
        %165 = vbcast.lane.b32.xlu0 %v155, %s164
        %v166 = vpop.permute.xlu0 %165
        %s168 = sor.u32 256, 24
        %169 = vbcast.lane.b32.xlu0 %v155, %s168
        %v170 = vpop.permute.xlu0 %169
        %s172 = sor.u32 256, 32
        %173 = vbcast.lane.b32.xlu0 %v155, %s172
        %v174 = vpop.permute.xlu0 %173
        %s176 = sor.u32 256, 40
        %177 = vbcast.lane.b32.xlu0 %v155, %s176
        %v178 = vpop.permute.xlu0 %177
        %s180 = sor.u32 256, 48
        %181 = vbcast.lane.b32.xlu0 %v155, %s180
        %v182 = vpop.permute.xlu0 %181
        %s184 = sor.u32 256, 56
        %185 = vbcast.lane.b32.xlu0 %v155, %s184
        %v186 = vpop.permute.xlu0 %185
        %s188 = sor.u32 256, 64
        %189 = vbcast.lane.b32.xlu0 %v155, %s188
        %v190 = vpop.permute.xlu0 %189
        %s192 = sor.u32 256, 72
        %193 = vbcast.lane.b32.xlu0 %v155, %s192
        %v194 = vpop.permute.xlu0 %193
        %s196 = sor.u32 256, 80
        %197 = vbcast.lane.b32.xlu0 %v155, %s196
        %v198 = vpop.permute.xlu0 %197
        %s200 = sor.u32 256, 88
        %201 = vbcast.lane.b32.xlu0 %v155, %s200
        %v202 = vpop.permute.xlu0 %201
        %s204 = sor.u32 256, 96
        %205 = vbcast.lane.b32.xlu0 %v155, %s204
        %v206 = vpop.permute.xlu0 %205
        %s208 = sor.u32 256, 104
        %209 = vbcast.lane.b32.xlu0 %v155, %s208
        %v210 = vpop.permute.xlu0 %209
        %s212 = sor.u32 256, 112
        %213 = vbcast.lane.b32.xlu0 %v155, %s212
        %v214 = vpop.permute.xlu0 %213
        %s216 = sor.u32 256, 120
        %217 = vbcast.lane.b32.xlu0 %v155, %s216
        %v218 = vpop.permute.xlu0 %217
        %v219 = vlaneseq
        %v220 = vshrl.u32 %v219, 7
        %v221 = vsub.s32 1, %v220
        %v222 = vrot.slane %v150, %v221
        %224 = vbcast.lane.b32.xlu0 %v222, 256
        %v225 = vpop.permute.xlu0 %224
        %s227 = sor.u32 256, 8
        %228 = vbcast.lane.b32.xlu0 %v222, %s227
        %v229 = vpop.permute.xlu0 %228
        %s231 = sor.u32 256, 16
        %232 = vbcast.lane.b32.xlu0 %v222, %s231
        %v233 = vpop.permute.xlu0 %232
        %s235 = sor.u32 256, 24
        %236 = vbcast.lane.b32.xlu0 %v222, %s235
        %v237 = vpop.permute.xlu0 %236
        %s239 = sor.u32 256, 32
        %240 = vbcast.lane.b32.xlu0 %v222, %s239
        %v241 = vpop.permute.xlu0 %240
        %s243 = sor.u32 256, 40
        %244 = vbcast.lane.b32.xlu0 %v222, %s243
        %v245 = vpop.permute.xlu0 %244
        %s247 = sor.u32 256, 48
        %248 = vbcast.lane.b32.xlu0 %v222, %s247
        %v249 = vpop.permute.xlu0 %248
        %s251 = sor.u32 256, 56
        %252 = vbcast.lane.b32.xlu0 %v222, %s251
        %v253 = vpop.permute.xlu0 %252
        %s255 = sor.u32 256, 64
        %256 = vbcast.lane.b32.xlu0 %v222, %s255
        %v257 = vpop.permute.xlu0 %256
        %s259 = sor.u32 256, 72
        %260 = vbcast.lane.b32.xlu0 %v222, %s259
        %v261 = vpop.permute.xlu0 %260
        %s263 = sor.u32 256, 80
        %264 = vbcast.lane.b32.xlu0 %v222, %s263
        %v265 = vpop.permute.xlu0 %264
        %s267 = sor.u32 256, 88
        %268 = vbcast.lane.b32.xlu0 %v222, %s267
        %v269 = vpop.permute.xlu0 %268
        %s271 = sor.u32 256, 96
        %272 = vbcast.lane.b32.xlu0 %v222, %s271
        %v273 = vpop.permute.xlu0 %272
        %s275 = sor.u32 256, 104
        %276 = vbcast.lane.b32.xlu0 %v222, %s275
        %v277 = vpop.permute.xlu0 %276
        %s279 = sor.u32 256, 112
        %280 = vbcast.lane.b32.xlu0 %v222, %s279
        %v281 = vpop.permute.xlu0 %280
        %s283 = sor.u32 256, 120
        %284 = vbcast.lane.b32.xlu0 %v222, %s283
        %v285 = vpop.permute.xlu0 %284
        %v286 = vlaneseq
        %v287 = vshrl.u32 %v286, 7
        %v288 = vsub.s32 2, %v287
        %v289 = vrot.slane %v150, %v288
        %291 = vbcast.lane.b32.xlu0 %v289, 256
        %v292 = vpop.permute.xlu0 %291
        %s294 = sor.u32 256, 8
        %295 = vbcast.lane.b32.xlu0 %v289, %s294
        %v296 = vpop.permute.xlu0 %295
        %s298 = sor.u32 256, 16
        %299 = vbcast.lane.b32.xlu0 %v289, %s298
        %v300 = vpop.permute.xlu0 %299
        %s302 = sor.u32 256, 24
        %303 = vbcast.lane.b32.xlu0 %v289, %s302
        %v304 = vpop.permute.xlu0 %303
        %s306 = sor.u32 256, 32
        %307 = vbcast.lane.b32.xlu0 %v289, %s306
        %v308 = vpop.permute.xlu0 %307
        %s310 = sor.u32 256, 40
        %311 = vbcast.lane.b32.xlu0 %v289, %s310
        %v312 = vpop.permute.xlu0 %311
        %s314 = sor.u32 256, 48
        %315 = vbcast.lane.b32.xlu0 %v289, %s314
        %v316 = vpop.permute.xlu0 %315
        %s318 = sor.u32 256, 56
        %319 = vbcast.lane.b32.xlu0 %v289, %s318
        %v320 = vpop.permute.xlu0 %319
        %s322 = sor.u32 256, 64
        %323 = vbcast.lane.b32.xlu0 %v289, %s322
        %v324 = vpop.permute.xlu0 %323
        %s326 = sor.u32 256, 72
        %327 = vbcast.lane.b32.xlu0 %v289, %s326
        %v328 = vpop.permute.xlu0 %327
        %s330 = sor.u32 256, 80
        %331 = vbcast.lane.b32.xlu0 %v289, %s330
        %v332 = vpop.permute.xlu0 %331
        %s334 = sor.u32 256, 88
        %335 = vbcast.lane.b32.xlu0 %v289, %s334
        %v336 = vpop.permute.xlu0 %335
        %s338 = sor.u32 256, 96
        %339 = vbcast.lane.b32.xlu0 %v289, %s338
        %v340 = vpop.permute.xlu0 %339
        %s342 = sor.u32 256, 104
        %343 = vbcast.lane.b32.xlu0 %v289, %s342
        %v344 = vpop.permute.xlu0 %343
        %s346 = sor.u32 256, 112
        %347 = vbcast.lane.b32.xlu0 %v289, %s346
        %v348 = vpop.permute.xlu0 %347
        %s350 = sor.u32 256, 120
        %351 = vbcast.lane.b32.xlu0 %v289, %s350
        %v352 = vpop.permute.xlu0 %351
        %v353 = vlaneseq
        %v354 = vshrl.u32 %v353, 7
        %v355 = vsub.s32 3, %v354
        %v356 = vrot.slane %v150, %v355
        %358 = vbcast.lane.b32.xlu0 %v356, 256
        %v359 = vpop.permute.xlu0 %358
        %s361 = sor.u32 256, 8
        %362 = vbcast.lane.b32.xlu0 %v356, %s361
        %v363 = vpop.permute.xlu0 %362
        %s365 = sor.u32 256, 16
        %366 = vbcast.lane.b32.xlu0 %v356, %s365
        %v367 = vpop.permute.xlu0 %366
        %s369 = sor.u32 256, 24
        %370 = vbcast.lane.b32.xlu0 %v356, %s369
        %v371 = vpop.permute.xlu0 %370
        %s373 = sor.u32 256, 32
        %374 = vbcast.lane.b32.xlu0 %v356, %s373
        %v375 = vpop.permute.xlu0 %374
        %s377 = sor.u32 256, 40
        %378 = vbcast.lane.b32.xlu0 %v356, %s377
        %v379 = vpop.permute.xlu0 %378
        %s381 = sor.u32 256, 48
        %382 = vbcast.lane.b32.xlu0 %v356, %s381
        %v383 = vpop.permute.xlu0 %382
        %s385 = sor.u32 256, 56
        %386 = vbcast.lane.b32.xlu0 %v356, %s385
        %v387 = vpop.permute.xlu0 %386
        %s389 = sor.u32 256, 64
        %390 = vbcast.lane.b32.xlu0 %v356, %s389
        %v391 = vpop.permute.xlu0 %390
        %s393 = sor.u32 256, 72
        %394 = vbcast.lane.b32.xlu0 %v356, %s393
        %v395 = vpop.permute.xlu0 %394
        %s397 = sor.u32 256, 80
        %398 = vbcast.lane.b32.xlu0 %v356, %s397
        %v399 = vpop.permute.xlu0 %398
        %s401 = sor.u32 256, 88
        %402 = vbcast.lane.b32.xlu0 %v356, %s401
        %v403 = vpop.permute.xlu0 %402
        %s405 = sor.u32 256, 96
        %406 = vbcast.lane.b32.xlu0 %v356, %s405
        %v407 = vpop.permute.xlu0 %406
        %s409 = sor.u32 256, 104
        %410 = vbcast.lane.b32.xlu0 %v356, %s409
        %v411 = vpop.permute.xlu0 %410
        %s413 = sor.u32 256, 112
        %414 = vbcast.lane.b32.xlu0 %v356, %s413
        %v415 = vpop.permute.xlu0 %414
        %s417 = sor.u32 256, 120
        %418 = vbcast.lane.b32.xlu0 %v356, %s417
        %v419 = vpop.permute.xlu0 %418
        %v420 = vlaneseq
        %v421 = vshrl.u32 %v420, 7
        %v422 = vsub.s32 0, %v421
        %v423 = vrot.slane %v151, %v422
        %425 = vbcast.lane.b32.xlu0 %v423, 256
        %v426 = vpop.permute.xlu0 %425
        %s428 = sor.u32 256, 8
        %429 = vbcast.lane.b32.xlu0 %v423, %s428
        %v430 = vpop.permute.xlu0 %429
        %s432 = sor.u32 256, 16
        %433 = vbcast.lane.b32.xlu0 %v423, %s432
        %v434 = vpop.permute.xlu0 %433
        %s436 = sor.u32 256, 24
        %437 = vbcast.lane.b32.xlu0 %v423, %s436
        %v438 = vpop.permute.xlu0 %437
        %s440 = sor.u32 256, 32
        %441 = vbcast.lane.b32.xlu0 %v423, %s440
        %v442 = vpop.permute.xlu0 %441
        %s444 = sor.u32 256, 40
        %445 = vbcast.lane.b32.xlu0 %v423, %s444
        %v446 = vpop.permute.xlu0 %445
        %s448 = sor.u32 256, 48
        %449 = vbcast.lane.b32.xlu0 %v423, %s448
        %v450 = vpop.permute.xlu0 %449
        %s452 = sor.u32 256, 56
        %453 = vbcast.lane.b32.xlu0 %v423, %s452
        %v454 = vpop.permute.xlu0 %453
        %s456 = sor.u32 256, 64
        %457 = vbcast.lane.b32.xlu0 %v423, %s456
        %v458 = vpop.permute.xlu0 %457
        %s460 = sor.u32 256, 72
        %461 = vbcast.lane.b32.xlu0 %v423, %s460
        %v462 = vpop.permute.xlu0 %461
        %s464 = sor.u32 256, 80
        %465 = vbcast.lane.b32.xlu0 %v423, %s464
        %v466 = vpop.permute.xlu0 %465
        %s468 = sor.u32 256, 88
        %469 = vbcast.lane.b32.xlu0 %v423, %s468
        %v470 = vpop.permute.xlu0 %469
        %s472 = sor.u32 256, 96
        %473 = vbcast.lane.b32.xlu0 %v423, %s472
        %v474 = vpop.permute.xlu0 %473
        %s476 = sor.u32 256, 104
        %477 = vbcast.lane.b32.xlu0 %v423, %s476
        %v478 = vpop.permute.xlu0 %477
        %s480 = sor.u32 256, 112
        %481 = vbcast.lane.b32.xlu0 %v423, %s480
        %v482 = vpop.permute.xlu0 %481
        %s484 = sor.u32 256, 120
        %485 = vbcast.lane.b32.xlu0 %v423, %s484
        %v486 = vpop.permute.xlu0 %485
        %v487 = vlaneseq
        %v488 = vshrl.u32 %v487, 7
        %v489 = vsub.s32 1, %v488
        %v490 = vrot.slane %v151, %v489
        %492 = vbcast.lane.b32.xlu0 %v490, 256
        %v493 = vpop.permute.xlu0 %492
        %s495 = sor.u32 256, 8
        %496 = vbcast.lane.b32.xlu0 %v490, %s495
        %v497 = vpop.permute.xlu0 %496
        %s499 = sor.u32 256, 16
        %500 = vbcast.lane.b32.xlu0 %v490, %s499
        %v501 = vpop.permute.xlu0 %500
        %s503 = sor.u32 256, 24
        %504 = vbcast.lane.b32.xlu0 %v490, %s503
        %v505 = vpop.permute.xlu0 %504
        %s507 = sor.u32 256, 32
        %508 = vbcast.lane.b32.xlu0 %v490, %s507
        %v509 = vpop.permute.xlu0 %508
        %s511 = sor.u32 256, 40
        %512 = vbcast.lane.b32.xlu0 %v490, %s511
        %v513 = vpop.permute.xlu0 %512
        %s515 = sor.u32 256, 48
        %516 = vbcast.lane.b32.xlu0 %v490, %s515
        %v517 = vpop.permute.xlu0 %516
        %s519 = sor.u32 256, 56
        %520 = vbcast.lane.b32.xlu0 %v490, %s519
        %v521 = vpop.permute.xlu0 %520
        %s523 = sor.u32 256, 64
        %524 = vbcast.lane.b32.xlu0 %v490, %s523
        %v525 = vpop.permute.xlu0 %524
        %s527 = sor.u32 256, 72
        %528 = vbcast.lane.b32.xlu0 %v490, %s527
        %v529 = vpop.permute.xlu0 %528
        %s531 = sor.u32 256, 80
        %532 = vbcast.lane.b32.xlu0 %v490, %s531
        %v533 = vpop.permute.xlu0 %532
        %s535 = sor.u32 256, 88
        %536 = vbcast.lane.b32.xlu0 %v490, %s535
        %v537 = vpop.permute.xlu0 %536
        %s539 = sor.u32 256, 96
        %540 = vbcast.lane.b32.xlu0 %v490, %s539
        %v541 = vpop.permute.xlu0 %540
        %s543 = sor.u32 256, 104
        %544 = vbcast.lane.b32.xlu0 %v490, %s543
        %v545 = vpop.permute.xlu0 %544
        %s547 = sor.u32 256, 112
        %548 = vbcast.lane.b32.xlu0 %v490, %s547
        %v549 = vpop.permute.xlu0 %548
        %s551 = sor.u32 256, 120
        %552 = vbcast.lane.b32.xlu0 %v490, %s551
        %v553 = vpop.permute.xlu0 %552
        %v554 = vlaneseq
        %v555 = vshrl.u32 %v554, 7
        %v556 = vsub.s32 2, %v555
        %v557 = vrot.slane %v151, %v556
        %559 = vbcast.lane.b32.xlu0 %v557, 256
        %v560 = vpop.permute.xlu0 %559
        %s562 = sor.u32 256, 8
        %563 = vbcast.lane.b32.xlu0 %v557, %s562
        %v564 = vpop.permute.xlu0 %563
        %s566 = sor.u32 256, 16
        %567 = vbcast.lane.b32.xlu0 %v557, %s566
        %v568 = vpop.permute.xlu0 %567
        %s570 = sor.u32 256, 24
        %571 = vbcast.lane.b32.xlu0 %v557, %s570
        %v572 = vpop.permute.xlu0 %571
        %s574 = sor.u32 256, 32
        %575 = vbcast.lane.b32.xlu0 %v557, %s574
        %v576 = vpop.permute.xlu0 %575
        %s578 = sor.u32 256, 40
        %579 = vbcast.lane.b32.xlu0 %v557, %s578
        %v580 = vpop.permute.xlu0 %579
        %s582 = sor.u32 256, 48
        %583 = vbcast.lane.b32.xlu0 %v557, %s582
        %v584 = vpop.permute.xlu0 %583
        %s586 = sor.u32 256, 56
        %587 = vbcast.lane.b32.xlu0 %v557, %s586
        %v588 = vpop.permute.xlu0 %587
        %s590 = sor.u32 256, 64
        %591 = vbcast.lane.b32.xlu0 %v557, %s590
        %v592 = vpop.permute.xlu0 %591
        %s594 = sor.u32 256, 72
        %595 = vbcast.lane.b32.xlu0 %v557, %s594
        %v596 = vpop.permute.xlu0 %595
        %s598 = sor.u32 256, 80
        %599 = vbcast.lane.b32.xlu0 %v557, %s598
        %v600 = vpop.permute.xlu0 %599
        %s602 = sor.u32 256, 88
        %603 = vbcast.lane.b32.xlu0 %v557, %s602
        %v604 = vpop.permute.xlu0 %603
        %s606 = sor.u32 256, 96
        %607 = vbcast.lane.b32.xlu0 %v557, %s606
        %v608 = vpop.permute.xlu0 %607
        %s610 = sor.u32 256, 104
        %611 = vbcast.lane.b32.xlu0 %v557, %s610
        %v612 = vpop.permute.xlu0 %611
        %s614 = sor.u32 256, 112
        %615 = vbcast.lane.b32.xlu0 %v557, %s614
        %v616 = vpop.permute.xlu0 %615
        %s618 = sor.u32 256, 120
        %619 = vbcast.lane.b32.xlu0 %v557, %s618
        %v620 = vpop.permute.xlu0 %619
        %v621 = vlaneseq
        %v622 = vshrl.u32 %v621, 7
        %v623 = vsub.s32 3, %v622
        %v624 = vrot.slane %v151, %v623
        %626 = vbcast.lane.b32.xlu0 %v624, 256
        %v627 = vpop.permute.xlu0 %626
        %s629 = sor.u32 256, 8
        %630 = vbcast.lane.b32.xlu0 %v624, %s629
        %v631 = vpop.permute.xlu0 %630
        %s633 = sor.u32 256, 16
        %634 = vbcast.lane.b32.xlu0 %v624, %s633
        %v635 = vpop.permute.xlu0 %634
        %s637 = sor.u32 256, 24
        %638 = vbcast.lane.b32.xlu0 %v624, %s637
        %v639 = vpop.permute.xlu0 %638
        %s641 = sor.u32 256, 32
        %642 = vbcast.lane.b32.xlu0 %v624, %s641
        %v643 = vpop.permute.xlu0 %642
        %s645 = sor.u32 256, 40
        %646 = vbcast.lane.b32.xlu0 %v624, %s645
        %v647 = vpop.permute.xlu0 %646
        %s649 = sor.u32 256, 48
        %650 = vbcast.lane.b32.xlu0 %v624, %s649
        %v651 = vpop.permute.xlu0 %650
        %s653 = sor.u32 256, 56
        %654 = vbcast.lane.b32.xlu0 %v624, %s653
        %v655 = vpop.permute.xlu0 %654
        %s657 = sor.u32 256, 64
        %658 = vbcast.lane.b32.xlu0 %v624, %s657
        %v659 = vpop.permute.xlu0 %658
        %s661 = sor.u32 256, 72
        %662 = vbcast.lane.b32.xlu0 %v624, %s661
        %v663 = vpop.permute.xlu0 %662
        %s665 = sor.u32 256, 80
        %666 = vbcast.lane.b32.xlu0 %v624, %s665
        %v667 = vpop.permute.xlu0 %666
        %s669 = sor.u32 256, 88
        %670 = vbcast.lane.b32.xlu0 %v624, %s669
        %v671 = vpop.permute.xlu0 %670
        %s673 = sor.u32 256, 96
        %674 = vbcast.lane.b32.xlu0 %v624, %s673
        %v675 = vpop.permute.xlu0 %674
        %s677 = sor.u32 256, 104
        %678 = vbcast.lane.b32.xlu0 %v624, %s677
        %v679 = vpop.permute.xlu0 %678
        %s681 = sor.u32 256, 112
        %682 = vbcast.lane.b32.xlu0 %v624, %s681
        %v683 = vpop.permute.xlu0 %682
        %s685 = sor.u32 256, 120
        %686 = vbcast.lane.b32.xlu0 %v624, %s685
        %v687 = vpop.permute.xlu0 %686
        %vm688 = vcmask 7168
        %v689 = vsel %vm688, %v158, %v426
        %v690 = vsel %vm688, %v162, %v430
        %v691 = vsel %vm688, %v166, %v434
        %v692 = vsel %vm688, %v170, %v438
        %v693 = vsel %vm688, %v174, %v442
        %v694 = vsel %vm688, %v178, %v446
        %v695 = vsel %vm688, %v182, %v450
        %v696 = vsel %vm688, %v186, %v454
        %v697 = vsel %vm688, %v190, %v458
        %v698 = vsel %vm688, %v194, %v462
        %v699 = vsel %vm688, %v198, %v466
        %v700 = vsel %vm688, %v202, %v470
        %v701 = vsel %vm688, %v206, %v474
        %v702 = vsel %vm688, %v210, %v478
        %v703 = vsel %vm688, %v214, %v482
        %v704 = vsel %vm688, %v218, %v486
        %v705 = vsel %vm688, %v225, %v493
        %v706 = vsel %vm688, %v229, %v497
        %v707 = vsel %vm688, %v233, %v501
        %v708 = vsel %vm688, %v237, %v505
        %v709 = vsel %vm688, %v241, %v509
        %v710 = vsel %vm688, %v245, %v513
        %v711 = vsel %vm688, %v249, %v517
        %v712 = vsel %vm688, %v253, %v521
        %v713 = vsel %vm688, %v257, %v525
        %v714 = vsel %vm688, %v261, %v529
        %v715 = vsel %vm688, %v265, %v533
        %v716 = vsel %vm688, %v269, %v537
        %v717 = vsel %vm688, %v273, %v541
        %v718 = vsel %vm688, %v277, %v545
        %v719 = vsel %vm688, %v281, %v549
        %v720 = vsel %vm688, %v285, %v553
        %v721 = vsel %vm688, %v292, %v560
        %v722 = vsel %vm688, %v296, %v564
        %v723 = vsel %vm688, %v300, %v568
        %v724 = vsel %vm688, %v304, %v572
        %v725 = vsel %vm688, %v308, %v576
        %v726 = vsel %vm688, %v312, %v580
        %v727 = vsel %vm688, %v316, %v584
        %v728 = vsel %vm688, %v320, %v588
        %v729 = vsel %vm688, %v324, %v592
        %v730 = vsel %vm688, %v328, %v596
        %v731 = vsel %vm688, %v332, %v600
        %v732 = vsel %vm688, %v336, %v604
        %v733 = vsel %vm688, %v340, %v608
        %v734 = vsel %vm688, %v344, %v612
        %v735 = vsel %vm688, %v348, %v616
        %v736 = vsel %vm688, %v352, %v620
        %v737 = vsel %vm688, %v359, %v627
        %v738 = vsel %vm688, %v363, %v631
        %v739 = vsel %vm688, %v367, %v635
        %v740 = vsel %vm688, %v371, %v639
        %v741 = vsel %vm688, %v375, %v643
        %v742 = vsel %vm688, %v379, %v647
        %v743 = vsel %vm688, %v383, %v651
        %v744 = vsel %vm688, %v387, %v655
        %v745 = vsel %vm688, %v391, %v659
        %v746 = vsel %vm688, %v395, %v663
        %v747 = vsel %vm688, %v399, %v667
        %v748 = vsel %vm688, %v403, %v671
        %v749 = vsel %vm688, %v407, %v675
        %v750 = vsel %vm688, %v411, %v679
        %v751 = vsel %vm688, %v415, %v683
        %v752 = vsel %vm688, %v419, %v687
        %v753 = vcombine.low %v689, %v721
        %v754 = vcombine.high %v689, %v721
        %v756 = vunpack.c.l.s4 1983009808
        %v757 = vunpack.c.0.s8 %v756
        %v758 = vlaneseq
        %v759 = vshrl.u32 %v758, 7
        %v760 = vsub.s32 %v757, %v759
        %v761 = vrot.slane %v753, %v760
        %v763 = vunpack.c.l.s4 1983009808
        %v764 = vunpack.c.0.s8 %v763
        %v765 = vlaneseq
        %v766 = vshrl.u32 %v765, 7
        %v767 = vsub.s32 %v764, %v766
        %v768 = vrot.slane %v754, %v767
        %v769 = vcombine.low %v705, %v737
        %v770 = vcombine.high %v705, %v737
        %v772 = vunpack.c.l.s4 1983009808
        %v773 = vunpack.c.0.s8 %v772
        %v774 = vlaneseq
        %v775 = vshrl.u32 %v774, 7
        %v776 = vsub.s32 %v773, %v775
        %v777 = vrot.slane %v769, %v776
        %v779 = vunpack.c.l.s4 1983009808
        %v780 = vunpack.c.0.s8 %v779
        %v781 = vlaneseq
        %v782 = vshrl.u32 %v781, 7
        %v783 = vsub.s32 %v780, %v782
        %v784 = vrot.slane %v770, %v783
        %v785 = vcombine.low %v761, %v777
        %v786 = vcombine.high %v761, %v777
        %v788 = vunpack.c.l.s4 1934713408
        %v789 = vunpack.c.0.s8 %v788
        %v790 = vlaneseq
        %v791 = vshrl.u32 %v790, 7
        %v792 = vsub.s32 %v789, %v791
        %v793 = vrot.slane %v785, %v792
        %v795 = vunpack.c.l.s4 1934713408
        %v796 = vunpack.c.0.s8 %v795
        %v797 = vlaneseq
        %v798 = vshrl.u32 %v797, 7
        %v799 = vsub.s32 %v796, %v798
        %v800 = vrot.slane %v786, %v799
        %v801 = vcombine.low %v768, %v784
        %v802 = vcombine.high %v768, %v784
        %v804 = vunpack.c.l.s4 1934713408
        %v805 = vunpack.c.0.s8 %v804
        %v806 = vlaneseq
        %v807 = vshrl.u32 %v806, 7
        %v808 = vsub.s32 %v805, %v807
        %v809 = vrot.slane %v801, %v808
        %v811 = vunpack.c.l.s4 1934713408
        %v812 = vunpack.c.0.s8 %v811
        %v813 = vlaneseq
        %v814 = vshrl.u32 %v813, 7
        %v815 = vsub.s32 %v812, %v814
        %v816 = vrot.slane %v802, %v815
        %v817 = vcombine.high %v793, 0.0
        %v818 = vcombine.high %v800, 0.0
        %v819 = vcombine.high %v809, 0.0
        %v820 = vcombine.high %v816, 0.0
        %v821 = vcombine.low %v690, %v722
        %v822 = vcombine.high %v690, %v722
        %v824 = vunpack.c.l.s4 1983009808
        %v825 = vunpack.c.0.s8 %v824
        %v826 = vlaneseq
        %v827 = vshrl.u32 %v826, 7
        %v828 = vsub.s32 %v825, %v827
        %v829 = vrot.slane %v821, %v828
        %v831 = vunpack.c.l.s4 1983009808
        %v832 = vunpack.c.0.s8 %v831
        %v833 = vlaneseq
        %v834 = vshrl.u32 %v833, 7
        %v835 = vsub.s32 %v832, %v834
        %v836 = vrot.slane %v822, %v835
        %v837 = vcombine.low %v706, %v738
        %v838 = vcombine.high %v706, %v738
        %v840 = vunpack.c.l.s4 1983009808
        %v841 = vunpack.c.0.s8 %v840
        %v842 = vlaneseq
        %v843 = vshrl.u32 %v842, 7
        %v844 = vsub.s32 %v841, %v843
        %v845 = vrot.slane %v837, %v844
        %v847 = vunpack.c.l.s4 1983009808
        %v848 = vunpack.c.0.s8 %v847
        %v849 = vlaneseq
        %v850 = vshrl.u32 %v849, 7
        %v851 = vsub.s32 %v848, %v850
        %v852 = vrot.slane %v838, %v851
        %v853 = vcombine.low %v829, %v845
        %v854 = vcombine.high %v829, %v845
        %v856 = vunpack.c.l.s4 1934713408
        %v857 = vunpack.c.0.s8 %v856
        %v858 = vlaneseq
        %v859 = vshrl.u32 %v858, 7
        %v860 = vsub.s32 %v857, %v859
        %v861 = vrot.slane %v853, %v860
        %v863 = vunpack.c.l.s4 1934713408
        %v864 = vunpack.c.0.s8 %v863
        %v865 = vlaneseq
        %v866 = vshrl.u32 %v865, 7
        %v867 = vsub.s32 %v864, %v866
        %v868 = vrot.slane %v854, %v867
        %v869 = vcombine.low %v836, %v852
        %v870 = vcombine.high %v836, %v852
        %v872 = vunpack.c.l.s4 1934713408
        %v873 = vunpack.c.0.s8 %v872
        %v874 = vlaneseq
        %v875 = vshrl.u32 %v874, 7
        %v876 = vsub.s32 %v873, %v875
        %v877 = vrot.slane %v869, %v876
        %v879 = vunpack.c.l.s4 1934713408
        %v880 = vunpack.c.0.s8 %v879
        %v881 = vlaneseq
        %v882 = vshrl.u32 %v881, 7
        %v883 = vsub.s32 %v880, %v882
        %v884 = vrot.slane %v870, %v883
        %v885 = vcombine.high %v861, 0.0
        %v886 = vcombine.high %v868, 0.0
        %v887 = vcombine.high %v877, 0.0
        %v888 = vcombine.high %v884, 0.0
        %v889 = vcombine.low %v691, %v723
        %v890 = vcombine.high %v691, %v723
        %v892 = vunpack.c.l.s4 1983009808
        %v893 = vunpack.c.0.s8 %v892
        %v894 = vlaneseq
        %v895 = vshrl.u32 %v894, 7
        %v896 = vsub.s32 %v893, %v895
        %v897 = vrot.slane %v889, %v896
        %v899 = vunpack.c.l.s4 1983009808
        %v900 = vunpack.c.0.s8 %v899
        %v901 = vlaneseq
        %v902 = vshrl.u32 %v901, 7
        %v903 = vsub.s32 %v900, %v902
        %v904 = vrot.slane %v890, %v903
        %v905 = vcombine.low %v707, %v739
        %v906 = vcombine.high %v707, %v739
        %v908 = vunpack.c.l.s4 1983009808
        %v909 = vunpack.c.0.s8 %v908
        %v910 = vlaneseq
        %v911 = vshrl.u32 %v910, 7
        %v912 = vsub.s32 %v909, %v911
        %v913 = vrot.slane %v905, %v912
        %v915 = vunpack.c.l.s4 1983009808
        %v916 = vunpack.c.0.s8 %v915
        %v917 = vlaneseq
        %v918 = vshrl.u32 %v917, 7
        %v919 = vsub.s32 %v916, %v918
        %v920 = vrot.slane %v906, %v919
        %v921 = vcombine.low %v897, %v913
        %v922 = vcombine.high %v897, %v913
        %v924 = vunpack.c.l.s4 1934713408
        %v925 = vunpack.c.0.s8 %v924
        %v926 = vlaneseq
        %v927 = vshrl.u32 %v926, 7
        %v928 = vsub.s32 %v925, %v927
        %v929 = vrot.slane %v921, %v928
        %v931 = vunpack.c.l.s4 1934713408
        %v932 = vunpack.c.0.s8 %v931
        %v933 = vlaneseq
        %v934 = vshrl.u32 %v933, 7
        %v935 = vsub.s32 %v932, %v934
        %v936 = vrot.slane %v922, %v935
        %v937 = vcombine.low %v904, %v920
        %v938 = vcombine.high %v904, %v920
        %v940 = vunpack.c.l.s4 1934713408
        %v941 = vunpack.c.0.s8 %v940
        %v942 = vlaneseq
        %v943 = vshrl.u32 %v942, 7
        %v944 = vsub.s32 %v941, %v943
        %v945 = vrot.slane %v937, %v944
        %v947 = vunpack.c.l.s4 1934713408
        %v948 = vunpack.c.0.s8 %v947
        %v949 = vlaneseq
        %v950 = vshrl.u32 %v949, 7
        %v951 = vsub.s32 %v948, %v950
        %v952 = vrot.slane %v938, %v951
        %v953 = vcombine.high %v929, 0.0
        %v954 = vcombine.high %v936, 0.0
        %v955 = vcombine.high %v945, 0.0
        %v956 = vcombine.high %v952, 0.0
        %v957 = vcombine.low %v692, %v724
        %v958 = vcombine.high %v692, %v724
        %v960 = vunpack.c.l.s4 1983009808
        %v961 = vunpack.c.0.s8 %v960
        %v962 = vlaneseq
        %v963 = vshrl.u32 %v962, 7
        %v964 = vsub.s32 %v961, %v963
        %v965 = vrot.slane %v957, %v964
        %v967 = vunpack.c.l.s4 1983009808
        %v968 = vunpack.c.0.s8 %v967
        %v969 = vlaneseq
        %v970 = vshrl.u32 %v969, 7
        %v971 = vsub.s32 %v968, %v970
        %v972 = vrot.slane %v958, %v971
        %v973 = vcombine.low %v708, %v740
        %v974 = vcombine.high %v708, %v740
        %v976 = vunpack.c.l.s4 1983009808
        %v977 = vunpack.c.0.s8 %v976
        %v978 = vlaneseq
        %v979 = vshrl.u32 %v978, 7
        %v980 = vsub.s32 %v977, %v979
        %v981 = vrot.slane %v973, %v980
        %v983 = vunpack.c.l.s4 1983009808
        %v984 = vunpack.c.0.s8 %v983
        %v985 = vlaneseq
        %v986 = vshrl.u32 %v985, 7
        %v987 = vsub.s32 %v984, %v986
        %v988 = vrot.slane %v974, %v987
        %v989 = vcombine.low %v965, %v981
        %v990 = vcombine.high %v965, %v981
        %v992 = vunpack.c.l.s4 1934713408
        %v993 = vunpack.c.0.s8 %v992
        %v994 = vlaneseq
        %v995 = vshrl.u32 %v994, 7
        %v996 = vsub.s32 %v993, %v995
        %v997 = vrot.slane %v989, %v996
        %v999 = vunpack.c.l.s4 1934713408
        %v1000 = vunpack.c.0.s8 %v999
        %v1001 = vlaneseq
        %v1002 = vshrl.u32 %v1001, 7
        %v1003 = vsub.s32 %v1000, %v1002
        %v1004 = vrot.slane %v990, %v1003
        %v1005 = vcombine.low %v972, %v988
        %v1006 = vcombine.high %v972, %v988
        %v1008 = vunpack.c.l.s4 1934713408
        %v1009 = vunpack.c.0.s8 %v1008
        %v1010 = vlaneseq
        %v1011 = vshrl.u32 %v1010, 7
        %v1012 = vsub.s32 %v1009, %v1011
        %v1013 = vrot.slane %v1005, %v1012
        %v1015 = vunpack.c.l.s4 1934713408
        %v1016 = vunpack.c.0.s8 %v1015
        %v1017 = vlaneseq
        %v1018 = vshrl.u32 %v1017, 7
        %v1019 = vsub.s32 %v1016, %v1018
        %v1020 = vrot.slane %v1006, %v1019
        %v1021 = vcombine.high %v997, 0.0
        %v1022 = vcombine.high %v1004, 0.0
        %v1023 = vcombine.high %v1013, 0.0
        %v1024 = vcombine.high %v1020, 0.0
        %v1025 = vcombine.low %v693, %v725
        %v1026 = vcombine.high %v693, %v725
        %v1028 = vunpack.c.l.s4 1983009808
        %v1029 = vunpack.c.0.s8 %v1028
        %v1030 = vlaneseq
        %v1031 = vshrl.u32 %v1030, 7
        %v1032 = vsub.s32 %v1029, %v1031
        %v1033 = vrot.slane %v1025, %v1032
        %v1035 = vunpack.c.l.s4 1983009808
        %v1036 = vunpack.c.0.s8 %v1035
        %v1037 = vlaneseq
        %v1038 = vshrl.u32 %v1037, 7
        %v1039 = vsub.s32 %v1036, %v1038
        %v1040 = vrot.slane %v1026, %v1039
        %v1041 = vcombine.low %v709, %v741
        %v1042 = vcombine.high %v709, %v741
        %v1044 = vunpack.c.l.s4 1983009808
        %v1045 = vunpack.c.0.s8 %v1044
        %v1046 = vlaneseq
        %v1047 = vshrl.u32 %v1046, 7
        %v1048 = vsub.s32 %v1045, %v1047
        %v1049 = vrot.slane %v1041, %v1048
        %v1051 = vunpack.c.l.s4 1983009808
        %v1052 = vunpack.c.0.s8 %v1051
        %v1053 = vlaneseq
        %v1054 = vshrl.u32 %v1053, 7
        %v1055 = vsub.s32 %v1052, %v1054
        %v1056 = vrot.slane %v1042, %v1055
        %v1057 = vcombine.low %v1033, %v1049
        %v1058 = vcombine.high %v1033, %v1049
        %v1060 = vunpack.c.l.s4 1934713408
        %v1061 = vunpack.c.0.s8 %v1060
        %v1062 = vlaneseq
        %v1063 = vshrl.u32 %v1062, 7
        %v1064 = vsub.s32 %v1061, %v1063
        %v1065 = vrot.slane %v1057, %v1064
        %v1067 = vunpack.c.l.s4 1934713408
        %v1068 = vunpack.c.0.s8 %v1067
        %v1069 = vlaneseq
        %v1070 = vshrl.u32 %v1069, 7
        %v1071 = vsub.s32 %v1068, %v1070
        %v1072 = vrot.slane %v1058, %v1071
        %v1073 = vcombine.low %v1040, %v1056
        %v1074 = vcombine.high %v1040, %v1056
        %v1076 = vunpack.c.l.s4 1934713408
        %v1077 = vunpack.c.0.s8 %v1076
        %v1078 = vlaneseq
        %v1079 = vshrl.u32 %v1078, 7
        %v1080 = vsub.s32 %v1077, %v1079
        %v1081 = vrot.slane %v1073, %v1080
        %v1083 = vunpack.c.l.s4 1934713408
        %v1084 = vunpack.c.0.s8 %v1083
        %v1085 = vlaneseq
        %v1086 = vshrl.u32 %v1085, 7
        %v1087 = vsub.s32 %v1084, %v1086
        %v1088 = vrot.slane %v1074, %v1087
        %v1089 = vcombine.high %v1065, 0.0
        %v1090 = vcombine.high %v1072, 0.0
        %v1091 = vcombine.high %v1081, 0.0
        %v1092 = vcombine.high %v1088, 0.0
        %v1093 = vcombine.low %v694, %v726
        %v1094 = vcombine.high %v694, %v726
        %v1096 = vunpack.c.l.s4 1983009808
        %v1097 = vunpack.c.0.s8 %v1096
        %v1098 = vlaneseq
        %v1099 = vshrl.u32 %v1098, 7
        %v1100 = vsub.s32 %v1097, %v1099
        %v1101 = vrot.slane %v1093, %v1100
        %v1103 = vunpack.c.l.s4 1983009808
        %v1104 = vunpack.c.0.s8 %v1103
        %v1105 = vlaneseq
        %v1106 = vshrl.u32 %v1105, 7
        %v1107 = vsub.s32 %v1104, %v1106
        %v1108 = vrot.slane %v1094, %v1107
        %v1109 = vcombine.low %v710, %v742
        %v1110 = vcombine.high %v710, %v742
        %v1112 = vunpack.c.l.s4 1983009808
        %v1113 = vunpack.c.0.s8 %v1112
        %v1114 = vlaneseq
        %v1115 = vshrl.u32 %v1114, 7
        %v1116 = vsub.s32 %v1113, %v1115
        %v1117 = vrot.slane %v1109, %v1116
        %v1119 = vunpack.c.l.s4 1983009808
        %v1120 = vunpack.c.0.s8 %v1119
        %v1121 = vlaneseq
        %v1122 = vshrl.u32 %v1121, 7
        %v1123 = vsub.s32 %v1120, %v1122
        %v1124 = vrot.slane %v1110, %v1123
        %v1125 = vcombine.low %v1101, %v1117
        %v1126 = vcombine.high %v1101, %v1117
        %v1128 = vunpack.c.l.s4 1934713408
        %v1129 = vunpack.c.0.s8 %v1128
        %v1130 = vlaneseq
        %v1131 = vshrl.u32 %v1130, 7
        %v1132 = vsub.s32 %v1129, %v1131
        %v1133 = vrot.slane %v1125, %v1132
        %v1135 = vunpack.c.l.s4 1934713408
        %v1136 = vunpack.c.0.s8 %v1135
        %v1137 = vlaneseq
        %v1138 = vshrl.u32 %v1137, 7
        %v1139 = vsub.s32 %v1136, %v1138
        %v1140 = vrot.slane %v1126, %v1139
        %v1141 = vcombine.low %v1108, %v1124
        %v1142 = vcombine.high %v1108, %v1124
        %v1144 = vunpack.c.l.s4 1934713408
        %v1145 = vunpack.c.0.s8 %v1144
        %v1146 = vlaneseq
        %v1147 = vshrl.u32 %v1146, 7
        %v1148 = vsub.s32 %v1145, %v1147
        %v1149 = vrot.slane %v1141, %v1148
        %v1151 = vunpack.c.l.s4 1934713408
        %v1152 = vunpack.c.0.s8 %v1151
        %v1153 = vlaneseq
        %v1154 = vshrl.u32 %v1153, 7
        %v1155 = vsub.s32 %v1152, %v1154
        %v1156 = vrot.slane %v1142, %v1155
        %v1157 = vcombine.high %v1133, 0.0
        %v1158 = vcombine.high %v1140, 0.0
        %v1159 = vcombine.high %v1149, 0.0
        %v1160 = vcombine.high %v1156, 0.0
        %v1161 = vcombine.low %v695, %v727
        %v1162 = vcombine.high %v695, %v727
        %v1164 = vunpack.c.l.s4 1983009808
        %v1165 = vunpack.c.0.s8 %v1164
        %v1166 = vlaneseq
        %v1167 = vshrl.u32 %v1166, 7
        %v1168 = vsub.s32 %v1165, %v1167
        %v1169 = vrot.slane %v1161, %v1168
        %v1171 = vunpack.c.l.s4 1983009808
        %v1172 = vunpack.c.0.s8 %v1171
        %v1173 = vlaneseq
        %v1174 = vshrl.u32 %v1173, 7
        %v1175 = vsub.s32 %v1172, %v1174
        %v1176 = vrot.slane %v1162, %v1175
        %v1177 = vcombine.low %v711, %v743
        %v1178 = vcombine.high %v711, %v743
        %v1180 = vunpack.c.l.s4 1983009808
        %v1181 = vunpack.c.0.s8 %v1180
        %v1182 = vlaneseq
        %v1183 = vshrl.u32 %v1182, 7
        %v1184 = vsub.s32 %v1181, %v1183
        %v1185 = vrot.slane %v1177, %v1184
        %v1187 = vunpack.c.l.s4 1983009808
        %v1188 = vunpack.c.0.s8 %v1187
        %v1189 = vlaneseq
        %v1190 = vshrl.u32 %v1189, 7
        %v1191 = vsub.s32 %v1188, %v1190
        %v1192 = vrot.slane %v1178, %v1191
        %v1193 = vcombine.low %v1169, %v1185
        %v1194 = vcombine.high %v1169, %v1185
        %v1196 = vunpack.c.l.s4 1934713408
        %v1197 = vunpack.c.0.s8 %v1196
        %v1198 = vlaneseq
        %v1199 = vshrl.u32 %v1198, 7
        %v1200 = vsub.s32 %v1197, %v1199
        %v1201 = vrot.slane %v1193, %v1200
        %v1203 = vunpack.c.l.s4 1934713408
        %v1204 = vunpack.c.0.s8 %v1203
        %v1205 = vlaneseq
        %v1206 = vshrl.u32 %v1205, 7
        %v1207 = vsub.s32 %v1204, %v1206
        %v1208 = vrot.slane %v1194, %v1207
        %v1209 = vcombine.low %v1176, %v1192
        %v1210 = vcombine.high %v1176, %v1192
        %v1212 = vunpack.c.l.s4 1934713408
        %v1213 = vunpack.c.0.s8 %v1212
        %v1214 = vlaneseq
        %v1215 = vshrl.u32 %v1214, 7
        %v1216 = vsub.s32 %v1213, %v1215
        %v1217 = vrot.slane %v1209, %v1216
        %v1219 = vunpack.c.l.s4 1934713408
        %v1220 = vunpack.c.0.s8 %v1219
        %v1221 = vlaneseq
        %v1222 = vshrl.u32 %v1221, 7
        %v1223 = vsub.s32 %v1220, %v1222
        %v1224 = vrot.slane %v1210, %v1223
        %v1225 = vcombine.high %v1201, 0.0
        %v1226 = vcombine.high %v1208, 0.0
        %v1227 = vcombine.high %v1217, 0.0
        %v1228 = vcombine.high %v1224, 0.0
        %v1229 = vcombine.low %v696, %v728
        %v1230 = vcombine.high %v696, %v728
        %v1232 = vunpack.c.l.s4 1983009808
        %v1233 = vunpack.c.0.s8 %v1232
        %v1234 = vlaneseq
        %v1235 = vshrl.u32 %v1234, 7
        %v1236 = vsub.s32 %v1233, %v1235
        %v1237 = vrot.slane %v1229, %v1236
        %v1239 = vunpack.c.l.s4 1983009808
        %v1240 = vunpack.c.0.s8 %v1239
        %v1241 = vlaneseq
        %v1242 = vshrl.u32 %v1241, 7
        %v1243 = vsub.s32 %v1240, %v1242
        %v1244 = vrot.slane %v1230, %v1243
        %v1245 = vcombine.low %v712, %v744
        %v1246 = vcombine.high %v712, %v744
        %v1248 = vunpack.c.l.s4 1983009808
        %v1249 = vunpack.c.0.s8 %v1248
        %v1250 = vlaneseq
        %v1251 = vshrl.u32 %v1250, 7
        %v1252 = vsub.s32 %v1249, %v1251
        %v1253 = vrot.slane %v1245, %v1252
        %v1255 = vunpack.c.l.s4 1983009808
        %v1256 = vunpack.c.0.s8 %v1255
        %v1257 = vlaneseq
        %v1258 = vshrl.u32 %v1257, 7
        %v1259 = vsub.s32 %v1256, %v1258
        %v1260 = vrot.slane %v1246, %v1259
        %v1261 = vcombine.low %v1237, %v1253
        %v1262 = vcombine.high %v1237, %v1253
        %v1264 = vunpack.c.l.s4 1934713408
        %v1265 = vunpack.c.0.s8 %v1264
        %v1266 = vlaneseq
        %v1267 = vshrl.u32 %v1266, 7
        %v1268 = vsub.s32 %v1265, %v1267
        %v1269 = vrot.slane %v1261, %v1268
        %v1271 = vunpack.c.l.s4 1934713408
        %v1272 = vunpack.c.0.s8 %v1271
        %v1273 = vlaneseq
        %v1274 = vshrl.u32 %v1273, 7
        %v1275 = vsub.s32 %v1272, %v1274
        %v1276 = vrot.slane %v1262, %v1275
        %v1277 = vcombine.low %v1244, %v1260
        %v1278 = vcombine.high %v1244, %v1260
        %v1280 = vunpack.c.l.s4 1934713408
        %v1281 = vunpack.c.0.s8 %v1280
        %v1282 = vlaneseq
        %v1283 = vshrl.u32 %v1282, 7
        %v1284 = vsub.s32 %v1281, %v1283
        %v1285 = vrot.slane %v1277, %v1284
        %v1287 = vunpack.c.l.s4 1934713408
        %v1288 = vunpack.c.0.s8 %v1287
        %v1289 = vlaneseq
        %v1290 = vshrl.u32 %v1289, 7
        %v1291 = vsub.s32 %v1288, %v1290
        %v1292 = vrot.slane %v1278, %v1291
        %v1293 = vcombine.high %v1269, 0.0
        %v1294 = vcombine.high %v1276, 0.0
        %v1295 = vcombine.high %v1285, 0.0
        %v1296 = vcombine.high %v1292, 0.0
        %v1297 = vcombine.low %v697, %v729
        %v1298 = vcombine.high %v697, %v729
        %v1300 = vunpack.c.l.s4 1983009808
        %v1301 = vunpack.c.0.s8 %v1300
        %v1302 = vlaneseq
        %v1303 = vshrl.u32 %v1302, 7
        %v1304 = vsub.s32 %v1301, %v1303
        %v1305 = vrot.slane %v1297, %v1304
        %v1307 = vunpack.c.l.s4 1983009808
        %v1308 = vunpack.c.0.s8 %v1307
        %v1309 = vlaneseq
        %v1310 = vshrl.u32 %v1309, 7
        %v1311 = vsub.s32 %v1308, %v1310
        %v1312 = vrot.slane %v1298, %v1311
        %v1313 = vcombine.low %v713, %v745
        %v1314 = vcombine.high %v713, %v745
        %v1316 = vunpack.c.l.s4 1983009808
        %v1317 = vunpack.c.0.s8 %v1316
        %v1318 = vlaneseq
        %v1319 = vshrl.u32 %v1318, 7
        %v1320 = vsub.s32 %v1317, %v1319
        %v1321 = vrot.slane %v1313, %v1320
        %v1323 = vunpack.c.l.s4 1983009808
        %v1324 = vunpack.c.0.s8 %v1323
        %v1325 = vlaneseq
        %v1326 = vshrl.u32 %v1325, 7
        %v1327 = vsub.s32 %v1324, %v1326
        %v1328 = vrot.slane %v1314, %v1327
        %v1329 = vcombine.low %v1305, %v1321
        %v1330 = vcombine.high %v1305, %v1321
        %v1332 = vunpack.c.l.s4 1934713408
        %v1333 = vunpack.c.0.s8 %v1332
        %v1334 = vlaneseq
        %v1335 = vshrl.u32 %v1334, 7
        %v1336 = vsub.s32 %v1333, %v1335
        %v1337 = vrot.slane %v1329, %v1336
        %v1339 = vunpack.c.l.s4 1934713408
        %v1340 = vunpack.c.0.s8 %v1339
        %v1341 = vlaneseq
        %v1342 = vshrl.u32 %v1341, 7
        %v1343 = vsub.s32 %v1340, %v1342
        %v1344 = vrot.slane %v1330, %v1343
        %v1345 = vcombine.low %v1312, %v1328
        %v1346 = vcombine.high %v1312, %v1328
        %v1348 = vunpack.c.l.s4 1934713408
        %v1349 = vunpack.c.0.s8 %v1348
        %v1350 = vlaneseq
        %v1351 = vshrl.u32 %v1350, 7
        %v1352 = vsub.s32 %v1349, %v1351
        %v1353 = vrot.slane %v1345, %v1352
        %v1355 = vunpack.c.l.s4 1934713408
        %v1356 = vunpack.c.0.s8 %v1355
        %v1357 = vlaneseq
        %v1358 = vshrl.u32 %v1357, 7
        %v1359 = vsub.s32 %v1356, %v1358
        %v1360 = vrot.slane %v1346, %v1359
        %v1361 = vcombine.high %v1337, 0.0
        %v1362 = vcombine.high %v1344, 0.0
        %v1363 = vcombine.high %v1353, 0.0
        %v1364 = vcombine.high %v1360, 0.0
        %v1365 = vcombine.low %v698, %v730
        %v1366 = vcombine.high %v698, %v730
        %v1368 = vunpack.c.l.s4 1983009808
        %v1369 = vunpack.c.0.s8 %v1368
        %v1370 = vlaneseq
        %v1371 = vshrl.u32 %v1370, 7
        %v1372 = vsub.s32 %v1369, %v1371
        %v1373 = vrot.slane %v1365, %v1372
        %v1375 = vunpack.c.l.s4 1983009808
        %v1376 = vunpack.c.0.s8 %v1375
        %v1377 = vlaneseq
        %v1378 = vshrl.u32 %v1377, 7
        %v1379 = vsub.s32 %v1376, %v1378
        %v1380 = vrot.slane %v1366, %v1379
        %v1381 = vcombine.low %v714, %v746
        %v1382 = vcombine.high %v714, %v746
        %v1384 = vunpack.c.l.s4 1983009808
        %v1385 = vunpack.c.0.s8 %v1384
        %v1386 = vlaneseq
        %v1387 = vshrl.u32 %v1386, 7
        %v1388 = vsub.s32 %v1385, %v1387
        %v1389 = vrot.slane %v1381, %v1388
        %v1391 = vunpack.c.l.s4 1983009808
        %v1392 = vunpack.c.0.s8 %v1391
        %v1393 = vlaneseq
        %v1394 = vshrl.u32 %v1393, 7
        %v1395 = vsub.s32 %v1392, %v1394
        %v1396 = vrot.slane %v1382, %v1395
        %v1397 = vcombine.low %v1373, %v1389
        %v1398 = vcombine.high %v1373, %v1389
        %v1400 = vunpack.c.l.s4 1934713408
        %v1401 = vunpack.c.0.s8 %v1400
        %v1402 = vlaneseq
        %v1403 = vshrl.u32 %v1402, 7
        %v1404 = vsub.s32 %v1401, %v1403
        %v1405 = vrot.slane %v1397, %v1404
        %v1407 = vunpack.c.l.s4 1934713408
        %v1408 = vunpack.c.0.s8 %v1407
        %v1409 = vlaneseq
        %v1410 = vshrl.u32 %v1409, 7
        %v1411 = vsub.s32 %v1408, %v1410
        %v1412 = vrot.slane %v1398, %v1411
        %v1413 = vcombine.low %v1380, %v1396
        %v1414 = vcombine.high %v1380, %v1396
        %v1416 = vunpack.c.l.s4 1934713408
        %v1417 = vunpack.c.0.s8 %v1416
        %v1418 = vlaneseq
        %v1419 = vshrl.u32 %v1418, 7
        %v1420 = vsub.s32 %v1417, %v1419
        %v1421 = vrot.slane %v1413, %v1420
        %v1423 = vunpack.c.l.s4 1934713408
        %v1424 = vunpack.c.0.s8 %v1423
        %v1425 = vlaneseq
        %v1426 = vshrl.u32 %v1425, 7
        %v1427 = vsub.s32 %v1424, %v1426
        %v1428 = vrot.slane %v1414, %v1427
        %v1429 = vcombine.high %v1405, 0.0
        %v1430 = vcombine.high %v1412, 0.0
        %v1431 = vcombine.high %v1421, 0.0
        %v1432 = vcombine.high %v1428, 0.0
        %v1433 = vcombine.low %v699, %v731
        %v1434 = vcombine.high %v699, %v731
        %v1436 = vunpack.c.l.s4 1983009808
        %v1437 = vunpack.c.0.s8 %v1436
        %v1438 = vlaneseq
        %v1439 = vshrl.u32 %v1438, 7
        %v1440 = vsub.s32 %v1437, %v1439
        %v1441 = vrot.slane %v1433, %v1440
        %v1443 = vunpack.c.l.s4 1983009808
        %v1444 = vunpack.c.0.s8 %v1443
        %v1445 = vlaneseq
        %v1446 = vshrl.u32 %v1445, 7
        %v1447 = vsub.s32 %v1444, %v1446
        %v1448 = vrot.slane %v1434, %v1447
        %v1449 = vcombine.low %v715, %v747
        %v1450 = vcombine.high %v715, %v747
        %v1452 = vunpack.c.l.s4 1983009808
        %v1453 = vunpack.c.0.s8 %v1452
        %v1454 = vlaneseq
        %v1455 = vshrl.u32 %v1454, 7
        %v1456 = vsub.s32 %v1453, %v1455
        %v1457 = vrot.slane %v1449, %v1456
        %v1459 = vunpack.c.l.s4 1983009808
        %v1460 = vunpack.c.0.s8 %v1459
        %v1461 = vlaneseq
        %v1462 = vshrl.u32 %v1461, 7
        %v1463 = vsub.s32 %v1460, %v1462
        %v1464 = vrot.slane %v1450, %v1463
        %v1465 = vcombine.low %v1441, %v1457
        %v1466 = vcombine.high %v1441, %v1457
        %v1468 = vunpack.c.l.s4 1934713408
        %v1469 = vunpack.c.0.s8 %v1468
        %v1470 = vlaneseq
        %v1471 = vshrl.u32 %v1470, 7
        %v1472 = vsub.s32 %v1469, %v1471
        %v1473 = vrot.slane %v1465, %v1472
        %v1475 = vunpack.c.l.s4 1934713408
        %v1476 = vunpack.c.0.s8 %v1475
        %v1477 = vlaneseq
        %v1478 = vshrl.u32 %v1477, 7
        %v1479 = vsub.s32 %v1476, %v1478
        %v1480 = vrot.slane %v1466, %v1479
        %v1481 = vcombine.low %v1448, %v1464
        %v1482 = vcombine.high %v1448, %v1464
        %v1484 = vunpack.c.l.s4 1934713408
        %v1485 = vunpack.c.0.s8 %v1484
        %v1486 = vlaneseq
        %v1487 = vshrl.u32 %v1486, 7
        %v1488 = vsub.s32 %v1485, %v1487
        %v1489 = vrot.slane %v1481, %v1488
        %v1491 = vunpack.c.l.s4 1934713408
        %v1492 = vunpack.c.0.s8 %v1491
        %v1493 = vlaneseq
        %v1494 = vshrl.u32 %v1493, 7
        %v1495 = vsub.s32 %v1492, %v1494
        %v1496 = vrot.slane %v1482, %v1495
        %v1497 = vcombine.high %v1473, 0.0
        %v1498 = vcombine.high %v1480, 0.0
        %v1499 = vcombine.high %v1489, 0.0
        %v1500 = vcombine.high %v1496, 0.0
        %v1501 = vcombine.low %v700, %v732
        %v1502 = vcombine.high %v700, %v732
        %v1504 = vunpack.c.l.s4 1983009808
        %v1505 = vunpack.c.0.s8 %v1504
        %v1506 = vlaneseq
        %v1507 = vshrl.u32 %v1506, 7
        %v1508 = vsub.s32 %v1505, %v1507
        %v1509 = vrot.slane %v1501, %v1508
        %v1511 = vunpack.c.l.s4 1983009808
        %v1512 = vunpack.c.0.s8 %v1511
        %v1513 = vlaneseq
        %v1514 = vshrl.u32 %v1513, 7
        %v1515 = vsub.s32 %v1512, %v1514
        %v1516 = vrot.slane %v1502, %v1515
        %v1517 = vcombine.low %v716, %v748
        %v1518 = vcombine.high %v716, %v748
        %v1520 = vunpack.c.l.s4 1983009808
        %v1521 = vunpack.c.0.s8 %v1520
        %v1522 = vlaneseq
        %v1523 = vshrl.u32 %v1522, 7
        %v1524 = vsub.s32 %v1521, %v1523
        %v1525 = vrot.slane %v1517, %v1524
        %v1527 = vunpack.c.l.s4 1983009808
        %v1528 = vunpack.c.0.s8 %v1527
        %v1529 = vlaneseq
        %v1530 = vshrl.u32 %v1529, 7
        %v1531 = vsub.s32 %v1528, %v1530
        %v1532 = vrot.slane %v1518, %v1531
        %v1533 = vcombine.low %v1509, %v1525
        %v1534 = vcombine.high %v1509, %v1525
        %v1536 = vunpack.c.l.s4 1934713408
        %v1537 = vunpack.c.0.s8 %v1536
        %v1538 = vlaneseq
        %v1539 = vshrl.u32 %v1538, 7
        %v1540 = vsub.s32 %v1537, %v1539
        %v1541 = vrot.slane %v1533, %v1540
        %v1543 = vunpack.c.l.s4 1934713408
        %v1544 = vunpack.c.0.s8 %v1543
        %v1545 = vlaneseq
        %v1546 = vshrl.u32 %v1545, 7
        %v1547 = vsub.s32 %v1544, %v1546
        %v1548 = vrot.slane %v1534, %v1547
        %v1549 = vcombine.low %v1516, %v1532
        %v1550 = vcombine.high %v1516, %v1532
        %v1552 = vunpack.c.l.s4 1934713408
        %v1553 = vunpack.c.0.s8 %v1552
        %v1554 = vlaneseq
        %v1555 = vshrl.u32 %v1554, 7
        %v1556 = vsub.s32 %v1553, %v1555
        %v1557 = vrot.slane %v1549, %v1556
        %v1559 = vunpack.c.l.s4 1934713408
        %v1560 = vunpack.c.0.s8 %v1559
        %v1561 = vlaneseq
        %v1562 = vshrl.u32 %v1561, 7
        %v1563 = vsub.s32 %v1560, %v1562
        %v1564 = vrot.slane %v1550, %v1563
        %v1565 = vcombine.high %v1541, 0.0
        %v1566 = vcombine.high %v1548, 0.0
        %v1567 = vcombine.high %v1557, 0.0
        %v1568 = vcombine.high %v1564, 0.0
        %v1569 = vcombine.low %v701, %v733
        %v1570 = vcombine.high %v701, %v733
        %v1572 = vunpack.c.l.s4 1983009808
        %v1573 = vunpack.c.0.s8 %v1572
        %v1574 = vlaneseq
        %v1575 = vshrl.u32 %v1574, 7
        %v1576 = vsub.s32 %v1573, %v1575
        %v1577 = vrot.slane %v1569, %v1576
        %v1579 = vunpack.c.l.s4 1983009808
        %v1580 = vunpack.c.0.s8 %v1579
        %v1581 = vlaneseq
        %v1582 = vshrl.u32 %v1581, 7
        %v1583 = vsub.s32 %v1580, %v1582
        %v1584 = vrot.slane %v1570, %v1583
        %v1585 = vcombine.low %v717, %v749
        %v1586 = vcombine.high %v717, %v749
        %v1588 = vunpack.c.l.s4 1983009808
        %v1589 = vunpack.c.0.s8 %v1588
        %v1590 = vlaneseq
        %v1591 = vshrl.u32 %v1590, 7
        %v1592 = vsub.s32 %v1589, %v1591
        %v1593 = vrot.slane %v1585, %v1592
        %v1595 = vunpack.c.l.s4 1983009808
        %v1596 = vunpack.c.0.s8 %v1595
        %v1597 = vlaneseq
        %v1598 = vshrl.u32 %v1597, 7
        %v1599 = vsub.s32 %v1596, %v1598
        %v1600 = vrot.slane %v1586, %v1599
        %v1601 = vcombine.low %v1577, %v1593
        %v1602 = vcombine.high %v1577, %v1593
        %v1604 = vunpack.c.l.s4 1934713408
        %v1605 = vunpack.c.0.s8 %v1604
        %v1606 = vlaneseq
        %v1607 = vshrl.u32 %v1606, 7
        %v1608 = vsub.s32 %v1605, %v1607
        %v1609 = vrot.slane %v1601, %v1608
        %v1611 = vunpack.c.l.s4 1934713408
        %v1612 = vunpack.c.0.s8 %v1611
        %v1613 = vlaneseq
        %v1614 = vshrl.u32 %v1613, 7
        %v1615 = vsub.s32 %v1612, %v1614
        %v1616 = vrot.slane %v1602, %v1615
        %v1617 = vcombine.low %v1584, %v1600
        %v1618 = vcombine.high %v1584, %v1600
        %v1620 = vunpack.c.l.s4 1934713408
        %v1621 = vunpack.c.0.s8 %v1620
        %v1622 = vlaneseq
        %v1623 = vshrl.u32 %v1622, 7
        %v1624 = vsub.s32 %v1621, %v1623
        %v1625 = vrot.slane %v1617, %v1624
        %v1627 = vunpack.c.l.s4 1934713408
        %v1628 = vunpack.c.0.s8 %v1627
        %v1629 = vlaneseq
        %v1630 = vshrl.u32 %v1629, 7
        %v1631 = vsub.s32 %v1628, %v1630
        %v1632 = vrot.slane %v1618, %v1631
        %v1633 = vcombine.high %v1609, 0.0
        %v1634 = vcombine.high %v1616, 0.0
        %v1635 = vcombine.high %v1625, 0.0
        %v1636 = vcombine.high %v1632, 0.0
        %v1637 = vcombine.low %v702, %v734
        %v1638 = vcombine.high %v702, %v734
        %v1640 = vunpack.c.l.s4 1983009808
        %v1641 = vunpack.c.0.s8 %v1640
        %v1642 = vlaneseq
        %v1643 = vshrl.u32 %v1642, 7
        %v1644 = vsub.s32 %v1641, %v1643
        %v1645 = vrot.slane %v1637, %v1644
        %v1647 = vunpack.c.l.s4 1983009808
        %v1648 = vunpack.c.0.s8 %v1647
        %v1649 = vlaneseq
        %v1650 = vshrl.u32 %v1649, 7
        %v1651 = vsub.s32 %v1648, %v1650
        %v1652 = vrot.slane %v1638, %v1651
        %v1653 = vcombine.low %v718, %v750
        %v1654 = vcombine.high %v718, %v750
        %v1656 = vunpack.c.l.s4 1983009808
        %v1657 = vunpack.c.0.s8 %v1656
        %v1658 = vlaneseq
        %v1659 = vshrl.u32 %v1658, 7
        %v1660 = vsub.s32 %v1657, %v1659
        %v1661 = vrot.slane %v1653, %v1660
        %v1663 = vunpack.c.l.s4 1983009808
        %v1664 = vunpack.c.0.s8 %v1663
        %v1665 = vlaneseq
        %v1666 = vshrl.u32 %v1665, 7
        %v1667 = vsub.s32 %v1664, %v1666
        %v1668 = vrot.slane %v1654, %v1667
        %v1669 = vcombine.low %v1645, %v1661
        %v1670 = vcombine.high %v1645, %v1661
        %v1672 = vunpack.c.l.s4 1934713408
        %v1673 = vunpack.c.0.s8 %v1672
        %v1674 = vlaneseq
        %v1675 = vshrl.u32 %v1674, 7
        %v1676 = vsub.s32 %v1673, %v1675
        %v1677 = vrot.slane %v1669, %v1676
        %v1679 = vunpack.c.l.s4 1934713408
        %v1680 = vunpack.c.0.s8 %v1679
        %v1681 = vlaneseq
        %v1682 = vshrl.u32 %v1681, 7
        %v1683 = vsub.s32 %v1680, %v1682
        %v1684 = vrot.slane %v1670, %v1683
        %v1685 = vcombine.low %v1652, %v1668
        %v1686 = vcombine.high %v1652, %v1668
        %v1688 = vunpack.c.l.s4 1934713408
        %v1689 = vunpack.c.0.s8 %v1688
        %v1690 = vlaneseq
        %v1691 = vshrl.u32 %v1690, 7
        %v1692 = vsub.s32 %v1689, %v1691
        %v1693 = vrot.slane %v1685, %v1692
        %v1695 = vunpack.c.l.s4 1934713408
        %v1696 = vunpack.c.0.s8 %v1695
        %v1697 = vlaneseq
        %v1698 = vshrl.u32 %v1697, 7
        %v1699 = vsub.s32 %v1696, %v1698
        %v1700 = vrot.slane %v1686, %v1699
        %v1701 = vcombine.high %v1677, 0.0
        %v1702 = vcombine.high %v1684, 0.0
        %v1703 = vcombine.high %v1693, 0.0
        %v1704 = vcombine.high %v1700, 0.0
        %v1705 = vcombine.low %v703, %v735
        %v1706 = vcombine.high %v703, %v735
        %v1708 = vunpack.c.l.s4 1983009808
        %v1709 = vunpack.c.0.s8 %v1708
        %v1710 = vlaneseq
        %v1711 = vshrl.u32 %v1710, 7
        %v1712 = vsub.s32 %v1709, %v1711
        %v1713 = vrot.slane %v1705, %v1712
        %v1715 = vunpack.c.l.s4 1983009808
        %v1716 = vunpack.c.0.s8 %v1715
        %v1717 = vlaneseq
        %v1718 = vshrl.u32 %v1717, 7
        %v1719 = vsub.s32 %v1716, %v1718
        %v1720 = vrot.slane %v1706, %v1719
        %v1721 = vcombine.low %v719, %v751
        %v1722 = vcombine.high %v719, %v751
        %v1724 = vunpack.c.l.s4 1983009808
        %v1725 = vunpack.c.0.s8 %v1724
        %v1726 = vlaneseq
        %v1727 = vshrl.u32 %v1726, 7
        %v1728 = vsub.s32 %v1725, %v1727
        %v1729 = vrot.slane %v1721, %v1728
        %v1731 = vunpack.c.l.s4 1983009808
        %v1732 = vunpack.c.0.s8 %v1731
        %v1733 = vlaneseq
        %v1734 = vshrl.u32 %v1733, 7
        %v1735 = vsub.s32 %v1732, %v1734
        %v1736 = vrot.slane %v1722, %v1735
        %v1737 = vcombine.low %v1713, %v1729
        %v1738 = vcombine.high %v1713, %v1729
        %v1740 = vunpack.c.l.s4 1934713408
        %v1741 = vunpack.c.0.s8 %v1740
        %v1742 = vlaneseq
        %v1743 = vshrl.u32 %v1742, 7
        %v1744 = vsub.s32 %v1741, %v1743
        %v1745 = vrot.slane %v1737, %v1744
        %v1747 = vunpack.c.l.s4 1934713408
        %v1748 = vunpack.c.0.s8 %v1747
        %v1749 = vlaneseq
        %v1750 = vshrl.u32 %v1749, 7
        %v1751 = vsub.s32 %v1748, %v1750
        %v1752 = vrot.slane %v1738, %v1751
        %v1753 = vcombine.low %v1720, %v1736
        %v1754 = vcombine.high %v1720, %v1736
        %v1756 = vunpack.c.l.s4 1934713408
        %v1757 = vunpack.c.0.s8 %v1756
        %v1758 = vlaneseq
        %v1759 = vshrl.u32 %v1758, 7
        %v1760 = vsub.s32 %v1757, %v1759
        %v1761 = vrot.slane %v1753, %v1760
        %v1763 = vunpack.c.l.s4 1934713408
        %v1764 = vunpack.c.0.s8 %v1763
        %v1765 = vlaneseq
        %v1766 = vshrl.u32 %v1765, 7
        %v1767 = vsub.s32 %v1764, %v1766
        %v1768 = vrot.slane %v1754, %v1767
        %v1769 = vcombine.high %v1745, 0.0
        %v1770 = vcombine.high %v1752, 0.0
        %v1771 = vcombine.high %v1761, 0.0
        %v1772 = vcombine.high %v1768, 0.0
        %v1773 = vcombine.low %v704, %v736
        %v1774 = vcombine.high %v704, %v736
        %v1776 = vunpack.c.l.s4 1983009808
        %v1777 = vunpack.c.0.s8 %v1776
        %v1778 = vlaneseq
        %v1779 = vshrl.u32 %v1778, 7
        %v1780 = vsub.s32 %v1777, %v1779
        %v1781 = vrot.slane %v1773, %v1780
        %v1783 = vunpack.c.l.s4 1983009808
        %v1784 = vunpack.c.0.s8 %v1783
        %v1785 = vlaneseq
        %v1786 = vshrl.u32 %v1785, 7
        %v1787 = vsub.s32 %v1784, %v1786
        %v1788 = vrot.slane %v1774, %v1787
        %v1789 = vcombine.low %v720, %v752
        %v1790 = vcombine.high %v720, %v752
        %v1792 = vunpack.c.l.s4 1983009808
        %v1793 = vunpack.c.0.s8 %v1792
        %v1794 = vlaneseq
        %v1795 = vshrl.u32 %v1794, 7
        %v1796 = vsub.s32 %v1793, %v1795
        %v1797 = vrot.slane %v1789, %v1796
        %v1799 = vunpack.c.l.s4 1983009808
        %v1800 = vunpack.c.0.s8 %v1799
        %v1801 = vlaneseq
        %v1802 = vshrl.u32 %v1801, 7
        %v1803 = vsub.s32 %v1800, %v1802
        %v1804 = vrot.slane %v1790, %v1803
        %v1805 = vcombine.low %v1781, %v1797
        %v1806 = vcombine.high %v1781, %v1797
        %v1808 = vunpack.c.l.s4 1934713408
        %v1809 = vunpack.c.0.s8 %v1808
        %v1810 = vlaneseq
        %v1811 = vshrl.u32 %v1810, 7
        %v1812 = vsub.s32 %v1809, %v1811
        %v1813 = vrot.slane %v1805, %v1812
        %v1815 = vunpack.c.l.s4 1934713408
        %v1816 = vunpack.c.0.s8 %v1815
        %v1817 = vlaneseq
        %v1818 = vshrl.u32 %v1817, 7
        %v1819 = vsub.s32 %v1816, %v1818
        %v1820 = vrot.slane %v1806, %v1819
        %v1821 = vcombine.low %v1788, %v1804
        %v1822 = vcombine.high %v1788, %v1804
        %v1824 = vunpack.c.l.s4 1934713408
        %v1825 = vunpack.c.0.s8 %v1824
        %v1826 = vlaneseq
        %v1827 = vshrl.u32 %v1826, 7
        %v1828 = vsub.s32 %v1825, %v1827
        %v1829 = vrot.slane %v1821, %v1828
        %v1831 = vunpack.c.l.s4 1934713408
        %v1832 = vunpack.c.0.s8 %v1831
        %v1833 = vlaneseq
        %v1834 = vshrl.u32 %v1833, 7
        %v1835 = vsub.s32 %v1832, %v1834
        %v1836 = vrot.slane %v1822, %v1835
        %v1837 = vcombine.high %v1813, 0.0
        %v1838 = vcombine.high %v1820, 0.0
        %v1839 = vcombine.high %v1829, 0.0
        %v1840 = vcombine.high %v1836, 0.0
        %1842 = vrot.lane.b32.xlu0 %v817, 2
        %v1843 = vpop.permute.xlu0 %1842
        %1846 = vrot.lane.b32.xlu0 %v800, 4
        %v1847 = vpop.permute.xlu0 %1846
        %1850 = vrot.lane.b32.xlu0 %v818, 6
        %v1851 = vpop.permute.xlu0 %1850
        %1854 = vrot.lane.b32.xlu0 %v809, 8
        %v1855 = vpop.permute.xlu0 %1854
        %1858 = vrot.lane.b32.xlu0 %v819, 10
        %v1859 = vpop.permute.xlu0 %1858
        %1862 = vrot.lane.b32.xlu0 %v816, 12
        %v1863 = vpop.permute.xlu0 %1862
        %1866 = vrot.lane.b32.xlu0 %v820, 14
        %v1867 = vpop.permute.xlu0 %1866
        %1870 = vrot.lane.b32.xlu0 %v861, 16
        %v1871 = vpop.permute.xlu0 %1870
        %1874 = vrot.lane.b32.xlu0 %v885, 18
        %v1875 = vpop.permute.xlu0 %1874
        %1878 = vrot.lane.b32.xlu0 %v868, 20
        %v1879 = vpop.permute.xlu0 %1878
        %1882 = vrot.lane.b32.xlu0 %v886, 22
        %v1883 = vpop.permute.xlu0 %1882
        %1886 = vrot.lane.b32.xlu0 %v877, 24
        %v1887 = vpop.permute.xlu0 %1886
        %1890 = vrot.lane.b32.xlu0 %v887, 26
        %v1891 = vpop.permute.xlu0 %1890
        %1894 = vrot.lane.b32.xlu0 %v884, 28
        %v1895 = vpop.permute.xlu0 %1894
        %1898 = vrot.lane.b32.xlu0 %v888, 30
        %v1899 = vpop.permute.xlu0 %1898
        %1902 = vrot.lane.b32.xlu0 %v929, 32
        %v1903 = vpop.permute.xlu0 %1902
        %1906 = vrot.lane.b32.xlu0 %v953, 34
        %v1907 = vpop.permute.xlu0 %1906
        %1910 = vrot.lane.b32.xlu0 %v936, 36
        %v1911 = vpop.permute.xlu0 %1910
        %1914 = vrot.lane.b32.xlu0 %v954, 38
        %v1915 = vpop.permute.xlu0 %1914
        %1918 = vrot.lane.b32.xlu0 %v945, 40
        %v1919 = vpop.permute.xlu0 %1918
        %1922 = vrot.lane.b32.xlu0 %v955, 42
        %v1923 = vpop.permute.xlu0 %1922
        %1926 = vrot.lane.b32.xlu0 %v952, 44
        %v1927 = vpop.permute.xlu0 %1926
        %1930 = vrot.lane.b32.xlu0 %v956, 46
        %v1931 = vpop.permute.xlu0 %1930
        %1934 = vrot.lane.b32.xlu0 %v997, 48
        %v1935 = vpop.permute.xlu0 %1934
        %1938 = vrot.lane.b32.xlu0 %v1021, 50
        %v1939 = vpop.permute.xlu0 %1938
        %1942 = vrot.lane.b32.xlu0 %v1004, 52
        %v1943 = vpop.permute.xlu0 %1942
        %1946 = vrot.lane.b32.xlu0 %v1022, 54
        %v1947 = vpop.permute.xlu0 %1946
        %1950 = vrot.lane.b32.xlu0 %v1013, 56
        %v1951 = vpop.permute.xlu0 %1950
        %1954 = vrot.lane.b32.xlu0 %v1023, 58
        %v1955 = vpop.permute.xlu0 %1954
        %1958 = vrot.lane.b32.xlu0 %v1020, 60
        %v1959 = vpop.permute.xlu0 %1958
        %1962 = vrot.lane.b32.xlu0 %v1024, 62
        %v1963 = vpop.permute.xlu0 %1962
        %1966 = vrot.lane.b32.xlu0 %v1065, 64
        %v1967 = vpop.permute.xlu0 %1966
        %1970 = vrot.lane.b32.xlu0 %v1089, 66
        %v1971 = vpop.permute.xlu0 %1970
        %1974 = vrot.lane.b32.xlu0 %v1072, 68
        %v1975 = vpop.permute.xlu0 %1974
        %1978 = vrot.lane.b32.xlu0 %v1090, 70
        %v1979 = vpop.permute.xlu0 %1978
        %1982 = vrot.lane.b32.xlu0 %v1081, 72
        %v1983 = vpop.permute.xlu0 %1982
        %1986 = vrot.lane.b32.xlu0 %v1091, 74
        %v1987 = vpop.permute.xlu0 %1986
        %1990 = vrot.lane.b32.xlu0 %v1088, 76
        %v1991 = vpop.permute.xlu0 %1990
        %1994 = vrot.lane.b32.xlu0 %v1092, 78
        %v1995 = vpop.permute.xlu0 %1994
        %1998 = vrot.lane.b32.xlu0 %v1133, 80
        %v1999 = vpop.permute.xlu0 %1998
        %2002 = vrot.lane.b32.xlu0 %v1157, 82
        %v2003 = vpop.permute.xlu0 %2002
        %2006 = vrot.lane.b32.xlu0 %v1140, 84
        %v2007 = vpop.permute.xlu0 %2006
        %2010 = vrot.lane.b32.xlu0 %v1158, 86
        %v2011 = vpop.permute.xlu0 %2010
        %2014 = vrot.lane.b32.xlu0 %v1149, 88
        %v2015 = vpop.permute.xlu0 %2014
        %2018 = vrot.lane.b32.xlu0 %v1159, 90
        %v2019 = vpop.permute.xlu0 %2018
        %2022 = vrot.lane.b32.xlu0 %v1156, 92
        %v2023 = vpop.permute.xlu0 %2022
        %2026 = vrot.lane.b32.xlu0 %v1160, 94
        %v2027 = vpop.permute.xlu0 %2026
        %2030 = vrot.lane.b32.xlu0 %v1201, 96
        %v2031 = vpop.permute.xlu0 %2030
        %2034 = vrot.lane.b32.xlu0 %v1225, 98
        %v2035 = vpop.permute.xlu0 %2034
        %2038 = vrot.lane.b32.xlu0 %v1208, 100
        %v2039 = vpop.permute.xlu0 %2038
        %2042 = vrot.lane.b32.xlu0 %v1226, 102
        %v2043 = vpop.permute.xlu0 %2042
        %2046 = vrot.lane.b32.xlu0 %v1217, 104
        %v2047 = vpop.permute.xlu0 %2046
        %2050 = vrot.lane.b32.xlu0 %v1227, 106
        %v2051 = vpop.permute.xlu0 %2050
        %2054 = vrot.lane.b32.xlu0 %v1224, 108
        %v2055 = vpop.permute.xlu0 %2054
        %2058 = vrot.lane.b32.xlu0 %v1228, 110
        %v2059 = vpop.permute.xlu0 %2058
        %2062 = vrot.lane.b32.xlu0 %v1269, 112
        %v2063 = vpop.permute.xlu0 %2062
        %2066 = vrot.lane.b32.xlu0 %v1293, 114
        %v2067 = vpop.permute.xlu0 %2066
        %2070 = vrot.lane.b32.xlu0 %v1276, 116
        %v2071 = vpop.permute.xlu0 %2070
        %2074 = vrot.lane.b32.xlu0 %v1294, 118
        %v2075 = vpop.permute.xlu0 %2074
        %2078 = vrot.lane.b32.xlu0 %v1285, 120
        %v2079 = vpop.permute.xlu0 %2078
        %2082 = vrot.lane.b32.xlu0 %v1295, 122
        %v2083 = vpop.permute.xlu0 %2082
        %2086 = vrot.lane.b32.xlu0 %v1292, 124
        %v2087 = vpop.permute.xlu0 %2086
        %2090 = vrot.lane.b32.xlu0 %v1296, 126
        %v2091 = vpop.permute.xlu0 %2090
        %2094 = vrot.lane.b32.xlu0 %v1361, 2
        %v2095 = vpop.permute.xlu0 %2094
        %2098 = vrot.lane.b32.xlu0 %v1344, 4
        %v2099 = vpop.permute.xlu0 %2098
        %2102 = vrot.lane.b32.xlu0 %v1362, 6
        %v2103 = vpop.permute.xlu0 %2102
        %2106 = vrot.lane.b32.xlu0 %v1353, 8
        %v2107 = vpop.permute.xlu0 %2106
        %2110 = vrot.lane.b32.xlu0 %v1363, 10
        %v2111 = vpop.permute.xlu0 %2110
        %2114 = vrot.lane.b32.xlu0 %v1360, 12
        %v2115 = vpop.permute.xlu0 %2114
        %2118 = vrot.lane.b32.xlu0 %v1364, 14
        %v2119 = vpop.permute.xlu0 %2118
        %2122 = vrot.lane.b32.xlu0 %v1405, 16
        %v2123 = vpop.permute.xlu0 %2122
        %2126 = vrot.lane.b32.xlu0 %v1429, 18
        %v2127 = vpop.permute.xlu0 %2126
        %2130 = vrot.lane.b32.xlu0 %v1412, 20
        %v2131 = vpop.permute.xlu0 %2130
        %2134 = vrot.lane.b32.xlu0 %v1430, 22
        %v2135 = vpop.permute.xlu0 %2134
        %2138 = vrot.lane.b32.xlu0 %v1421, 24
        %v2139 = vpop.permute.xlu0 %2138
        %2142 = vrot.lane.b32.xlu0 %v1431, 26
        %v2143 = vpop.permute.xlu0 %2142
        %2146 = vrot.lane.b32.xlu0 %v1428, 28
        %v2147 = vpop.permute.xlu0 %2146
        %2150 = vrot.lane.b32.xlu0 %v1432, 30
        %v2151 = vpop.permute.xlu0 %2150
        %2154 = vrot.lane.b32.xlu0 %v1473, 32
        %v2155 = vpop.permute.xlu0 %2154
        %2158 = vrot.lane.b32.xlu0 %v1497, 34
        %v2159 = vpop.permute.xlu0 %2158
        %2162 = vrot.lane.b32.xlu0 %v1480, 36
        %v2163 = vpop.permute.xlu0 %2162
        %2166 = vrot.lane.b32.xlu0 %v1498, 38
        %v2167 = vpop.permute.xlu0 %2166
        %2170 = vrot.lane.b32.xlu0 %v1489, 40
        %v2171 = vpop.permute.xlu0 %2170
        %2174 = vrot.lane.b32.xlu0 %v1499, 42
        %v2175 = vpop.permute.xlu0 %2174
        %2178 = vrot.lane.b32.xlu0 %v1496, 44
        %v2179 = vpop.permute.xlu0 %2178
        %2182 = vrot.lane.b32.xlu0 %v1500, 46
        %v2183 = vpop.permute.xlu0 %2182
        %2186 = vrot.lane.b32.xlu0 %v1541, 48
        %v2187 = vpop.permute.xlu0 %2186
        %2190 = vrot.lane.b32.xlu0 %v1565, 50
        %v2191 = vpop.permute.xlu0 %2190
        %2194 = vrot.lane.b32.xlu0 %v1548, 52
        %v2195 = vpop.permute.xlu0 %2194
        %2198 = vrot.lane.b32.xlu0 %v1566, 54
        %v2199 = vpop.permute.xlu0 %2198
        %2202 = vrot.lane.b32.xlu0 %v1557, 56
        %v2203 = vpop.permute.xlu0 %2202
        %2206 = vrot.lane.b32.xlu0 %v1567, 58
        %v2207 = vpop.permute.xlu0 %2206
        %2210 = vrot.lane.b32.xlu0 %v1564, 60
        %v2211 = vpop.permute.xlu0 %2210
        %2214 = vrot.lane.b32.xlu0 %v1568, 62
        %v2215 = vpop.permute.xlu0 %2214
        %2218 = vrot.lane.b32.xlu0 %v1609, 64
        %v2219 = vpop.permute.xlu0 %2218
        %2222 = vrot.lane.b32.xlu0 %v1633, 66
        %v2223 = vpop.permute.xlu0 %2222
        %2226 = vrot.lane.b32.xlu0 %v1616, 68
        %v2227 = vpop.permute.xlu0 %2226
        %2230 = vrot.lane.b32.xlu0 %v1634, 70
        %v2231 = vpop.permute.xlu0 %2230
        %2234 = vrot.lane.b32.xlu0 %v1625, 72
        %v2235 = vpop.permute.xlu0 %2234
        %2238 = vrot.lane.b32.xlu0 %v1635, 74
        %v2239 = vpop.permute.xlu0 %2238
        %2242 = vrot.lane.b32.xlu0 %v1632, 76
        %v2243 = vpop.permute.xlu0 %2242
        %2246 = vrot.lane.b32.xlu0 %v1636, 78
        %v2247 = vpop.permute.xlu0 %2246
        %2250 = vrot.lane.b32.xlu0 %v1677, 80
        %v2251 = vpop.permute.xlu0 %2250
        %2254 = vrot.lane.b32.xlu0 %v1701, 82
        %v2255 = vpop.permute.xlu0 %2254
        %2258 = vrot.lane.b32.xlu0 %v1684, 84
        %v2259 = vpop.permute.xlu0 %2258
        %2262 = vrot.lane.b32.xlu0 %v1702, 86
        %v2263 = vpop.permute.xlu0 %2262
        %2266 = vrot.lane.b32.xlu0 %v1693, 88
        %v2267 = vpop.permute.xlu0 %2266
        %2270 = vrot.lane.b32.xlu0 %v1703, 90
        %v2271 = vpop.permute.xlu0 %2270
        %2274 = vrot.lane.b32.xlu0 %v1700, 92
        %v2275 = vpop.permute.xlu0 %2274
        %2278 = vrot.lane.b32.xlu0 %v1704, 94
        %v2279 = vpop.permute.xlu0 %2278
        %2282 = vrot.lane.b32.xlu0 %v1745, 96
        %v2283 = vpop.permute.xlu0 %2282
        %2286 = vrot.lane.b32.xlu0 %v1769, 98
        %v2287 = vpop.permute.xlu0 %2286
        %2290 = vrot.lane.b32.xlu0 %v1752, 100
        %v2291 = vpop.permute.xlu0 %2290
        %2294 = vrot.lane.b32.xlu0 %v1770, 102
        %v2295 = vpop.permute.xlu0 %2294
        %2298 = vrot.lane.b32.xlu0 %v1761, 104
        %v2299 = vpop.permute.xlu0 %2298
        %2302 = vrot.lane.b32.xlu0 %v1771, 106
        %v2303 = vpop.permute.xlu0 %2302
        %2306 = vrot.lane.b32.xlu0 %v1768, 108
        %v2307 = vpop.permute.xlu0 %2306
        %2310 = vrot.lane.b32.xlu0 %v1772, 110
        %v2311 = vpop.permute.xlu0 %2310
        %2314 = vrot.lane.b32.xlu0 %v1813, 112
        %v2315 = vpop.permute.xlu0 %2314
        %2318 = vrot.lane.b32.xlu0 %v1837, 114
        %v2319 = vpop.permute.xlu0 %2318
        %2322 = vrot.lane.b32.xlu0 %v1820, 116
        %v2323 = vpop.permute.xlu0 %2322
        %2326 = vrot.lane.b32.xlu0 %v1838, 118
        %v2327 = vpop.permute.xlu0 %2326
        %2330 = vrot.lane.b32.xlu0 %v1829, 120
        %v2331 = vpop.permute.xlu0 %2330
        %2334 = vrot.lane.b32.xlu0 %v1839, 122
        %v2335 = vpop.permute.xlu0 %2334
        %2338 = vrot.lane.b32.xlu0 %v1836, 124
        %v2339 = vpop.permute.xlu0 %2338
        %2342 = vrot.lane.b32.xlu0 %v1840, 126
        %v2343 = vpop.permute.xlu0 %2342
        %vm2345 = vcmask 15360
        %v2346 = vsel %vm2345, %v793, %v1843
        %vm2347 = vcmask 31744
        %v2348 = vsel %vm2347, %v2346, %v1847
        %vm2349 = vcmask 48128
        %v2350 = vsel %vm2349, %v2348, %v1851
        %vm2351 = vcmask 64512
        %v2352 = vsel %vm2351, %v2350, %v1855
        %vm2353 = vcmask 80896
        %v2354 = vsel %vm2353, %v2352, %v1859
        %vm2355 = vcmask 97280
        %v2356 = vsel %vm2355, %v2354, %v1863
        %vm2357 = vcmask 113664
        %v2358 = vsel %vm2357, %v2356, %v1867
        %vm2359 = vcmask 130048
        %v2360 = vsel %vm2359, %v2358, %v1871
        %vm2361 = vcmask 146432
        %v2362 = vsel %vm2361, %v2360, %v1875
        %vm2363 = vcmask 162816
        %v2364 = vsel %vm2363, %v2362, %v1879
        %vm2365 = vcmask 179200
        %v2366 = vsel %vm2365, %v2364, %v1883
        %vm2367 = vcmask 195584
        %v2368 = vsel %vm2367, %v2366, %v1887
        %vm2369 = vcmask 211968
        %v2370 = vsel %vm2369, %v2368, %v1891
        %vm2371 = vcmask 228352
        %v2372 = vsel %vm2371, %v2370, %v1895
        %vm2373 = vcmask 244736
        %v2374 = vsel %vm2373, %v2372, %v1899
        %vm2375 = vcmask 261120
        %v2376 = vsel %vm2375, %v2374, %v1903
        %vm2377 = vcmask 277504
        %v2378 = vsel %vm2377, %v2376, %v1907
        %vm2379 = vcmask 293888
        %v2380 = vsel %vm2379, %v2378, %v1911
        %vm2381 = vcmask 310272
        %v2382 = vsel %vm2381, %v2380, %v1915
        %vm2383 = vcmask 326656
        %v2384 = vsel %vm2383, %v2382, %v1919
        %vm2385 = vcmask 343040
        %v2386 = vsel %vm2385, %v2384, %v1923
        %vm2387 = vcmask 359424
        %v2388 = vsel %vm2387, %v2386, %v1927
        %vm2389 = vcmask 375808
        %v2390 = vsel %vm2389, %v2388, %v1931
        %vm2391 = vcmask 392192
        %v2392 = vsel %vm2391, %v2390, %v1935
        %vm2393 = vcmask 408576
        %v2394 = vsel %vm2393, %v2392, %v1939
        %vm2395 = vcmask 424960
        %v2396 = vsel %vm2395, %v2394, %v1943
        %vm2397 = vcmask 441344
        %v2398 = vsel %vm2397, %v2396, %v1947
        %vm2399 = vcmask 457728
        %v2400 = vsel %vm2399, %v2398, %v1951
        %vm2401 = vcmask 474112
        %v2402 = vsel %vm2401, %v2400, %v1955
        %vm2403 = vcmask 490496
        %v2404 = vsel %vm2403, %v2402, %v1959
        %vm2405 = vcmask 506880
        %v2406 = vsel %vm2405, %v2404, %v1963
        %vm2407 = vcmask 523264
        %v2408 = vsel %vm2407, %v2406, %v1967
        %vm2409 = vcmask 539648
        %v2410 = vsel %vm2409, %v2408, %v1971
        %vm2411 = vcmask 556032
        %v2412 = vsel %vm2411, %v2410, %v1975
        %vm2413 = vcmask 572416
        %v2414 = vsel %vm2413, %v2412, %v1979
        %vm2415 = vcmask 588800
        %v2416 = vsel %vm2415, %v2414, %v1983
        %vm2417 = vcmask 605184
        %v2418 = vsel %vm2417, %v2416, %v1987
        %vm2419 = vcmask 621568
        %v2420 = vsel %vm2419, %v2418, %v1991
        %vm2421 = vcmask 637952
        %v2422 = vsel %vm2421, %v2420, %v1995
        %vm2423 = vcmask 654336
        %v2424 = vsel %vm2423, %v2422, %v1999
        %vm2425 = vcmask 670720
        %v2426 = vsel %vm2425, %v2424, %v2003
        %vm2427 = vcmask 687104
        %v2428 = vsel %vm2427, %v2426, %v2007
        %vm2429 = vcmask 703488
        %v2430 = vsel %vm2429, %v2428, %v2011
        %vm2431 = vcmask 719872
        %v2432 = vsel %vm2431, %v2430, %v2015
        %vm2433 = vcmask 736256
        %v2434 = vsel %vm2433, %v2432, %v2019
        %vm2435 = vcmask 752640
        %v2436 = vsel %vm2435, %v2434, %v2023
        %vm2437 = vcmask 769024
        %v2438 = vsel %vm2437, %v2436, %v2027
        %vm2439 = vcmask 785408
        %v2440 = vsel %vm2439, %v2438, %v2031
        %vm2441 = vcmask 801792
        %v2442 = vsel %vm2441, %v2440, %v2035
        %vm2443 = vcmask 818176
        %v2444 = vsel %vm2443, %v2442, %v2039
        %vm2445 = vcmask 834560
        %v2446 = vsel %vm2445, %v2444, %v2043
        %vm2447 = vcmask 850944
        %v2448 = vsel %vm2447, %v2446, %v2047
        %vm2449 = vcmask 867328
        %v2450 = vsel %vm2449, %v2448, %v2051
        %vm2451 = vcmask 883712
        %v2452 = vsel %vm2451, %v2450, %v2055
        %vm2453 = vcmask 900096
        %v2454 = vsel %vm2453, %v2452, %v2059
        %vm2455 = vcmask 916480
        %v2456 = vsel %vm2455, %v2454, %v2063
        %vm2457 = vcmask 932864
        %v2458 = vsel %vm2457, %v2456, %v2067
        %vm2459 = vcmask 949248
        %v2460 = vsel %vm2459, %v2458, %v2071
        %vm2461 = vcmask 965632
        %v2462 = vsel %vm2461, %v2460, %v2075
        %vm2463 = vcmask 982016
        %v2464 = vsel %vm2463, %v2462, %v2079
        %vm2465 = vcmask 998400
        %v2466 = vsel %vm2465, %v2464, %v2083
        %vm2467 = vcmask 1014784
        %v2468 = vsel %vm2467, %v2466, %v2087
        %vm2469 = vcmask 1031168
        %v2470 = vsel %vm2469, %v2468, %v2091
        %v2471 = vsel %vm2345, %v1337, %v2095
        %v2472 = vsel %vm2347, %v2471, %v2099
        %v2473 = vsel %vm2349, %v2472, %v2103
        %v2474 = vsel %vm2351, %v2473, %v2107
        %v2475 = vsel %vm2353, %v2474, %v2111
        %v2476 = vsel %vm2355, %v2475, %v2115
        %v2477 = vsel %vm2357, %v2476, %v2119
        %v2478 = vsel %vm2359, %v2477, %v2123
        %v2479 = vsel %vm2361, %v2478, %v2127
        %v2480 = vsel %vm2363, %v2479, %v2131
        %v2481 = vsel %vm2365, %v2480, %v2135
        %v2482 = vsel %vm2367, %v2481, %v2139
        %v2483 = vsel %vm2369, %v2482, %v2143
        %v2484 = vsel %vm2371, %v2483, %v2147
        %v2485 = vsel %vm2373, %v2484, %v2151
        %v2486 = vsel %vm2375, %v2485, %v2155
        %v2487 = vsel %vm2377, %v2486, %v2159
        %v2488 = vsel %vm2379, %v2487, %v2163
        %v2489 = vsel %vm2381, %v2488, %v2167
        %v2490 = vsel %vm2383, %v2489, %v2171
        %v2491 = vsel %vm2385, %v2490, %v2175
        %v2492 = vsel %vm2387, %v2491, %v2179
        %v2493 = vsel %vm2389, %v2492, %v2183
        %v2494 = vsel %vm2391, %v2493, %v2187
        %v2495 = vsel %vm2393, %v2494, %v2191
        %v2496 = vsel %vm2395, %v2495, %v2195
        %v2497 = vsel %vm2397, %v2496, %v2199
        %v2498 = vsel %vm2399, %v2497, %v2203
        %v2499 = vsel %vm2401, %v2498, %v2207
        %v2500 = vsel %vm2403, %v2499, %v2211
        %v2501 = vsel %vm2405, %v2500, %v2215
        %v2502 = vsel %vm2407, %v2501, %v2219
        %v2503 = vsel %vm2409, %v2502, %v2223
        %v2504 = vsel %vm2411, %v2503, %v2227
        %v2505 = vsel %vm2413, %v2504, %v2231
        %v2506 = vsel %vm2415, %v2505, %v2235
        %v2507 = vsel %vm2417, %v2506, %v2239
        %v2508 = vsel %vm2419, %v2507, %v2243
        %v2509 = vsel %vm2421, %v2508, %v2247
        %v2510 = vsel %vm2423, %v2509, %v2251
        %v2511 = vsel %vm2425, %v2510, %v2255
        %v2512 = vsel %vm2427, %v2511, %v2259
        %v2513 = vsel %vm2429, %v2512, %v2263
        %v2514 = vsel %vm2431, %v2513, %v2267
        %v2515 = vsel %vm2433, %v2514, %v2271
        %v2516 = vsel %vm2435, %v2515, %v2275
        %v2517 = vsel %vm2437, %v2516, %v2279
        %v2518 = vsel %vm2439, %v2517, %v2283
        %v2519 = vsel %vm2441, %v2518, %v2287
        %v2520 = vsel %vm2443, %v2519, %v2291
        %v2521 = vsel %vm2445, %v2520, %v2295
        %v2522 = vsel %vm2447, %v2521, %v2299
        %v2523 = vsel %vm2449, %v2522, %v2303
        %v2524 = vsel %vm2451, %v2523, %v2307
        %v2525 = vsel %vm2453, %v2524, %v2311
        %v2526 = vsel %vm2455, %v2525, %v2315
        %v2527 = vsel %vm2457, %v2526, %v2319
        %v2528 = vsel %vm2459, %v2527, %v2323
        %v2529 = vsel %vm2461, %v2528, %v2327
        %v2530 = vsel %vm2463, %v2529, %v2331
        %v2531 = vsel %vm2465, %v2530, %v2335
        %v2532 = vsel %vm2467, %v2531, %v2339
        %v2533 = vsel %vm2469, %v2532, %v2343
        %v2536 = vcombine.low %v2470, %v2533
        %2538 = vst [vmem:[%s148] sm:$0xff] %v2536
        %s2539 = sand.u32 %s68, 1
        %s2540 = scalar_lea.sflag [#allocation4], %s2539
        %s2541 = sand.u32 %s68, 1
        %s2542 = smul.addr %s2541, 8
        %s2543 = scalar_lea.vmem [#allocation5], %s2542
        // Predicated region
        $region29: #{tpu_custom_call.1} parent=23 // pred_check
          %p2544 = pneg %p78
        $region30: #{tpu_custom_call.1} parent=23 // pred_check_branch
          %2546 = sbr.rel (%p2544) target = $region32
        $region31: #{tpu_custom_call.1} parent=23 // pred_region
          %s2547 = smul.u32 2, %s23
          %s2549 = ssub.s32 128, 128
          %2550 = vsyncadd %s2540, %s2549
          %s2551 = smul.addr %s22, 2
          %s2552 = sadd.s32 %s2547, %s2551
          %s2553 = smul.addr %s2552, 64
          %s2554 = scalar_lea.hbm %s1, %s2553
          %s2556 = sshll.u32 %s2543, 4
          %s2557 = int_to_ptr.vmem [resolvable:$true] %s2556
          %2559 = dma.vmem_to_hbm [thread:$0]  %s2557, 128, %s2554, %s2540
        $region32: #{tpu_custom_call.1} parent=23 // pred_fallthru
          _
      $region24: #{tpu_custom_call.1} parent=5 // pred_fallthru
        _
      %p2560 = scmp.le.s32.totalorder 2, %s13
      // Predicated region
      $region33: #{tpu_custom_call.1} parent=5 // pred_check
        %p2561 = pneg %p2560
      $region34: #{tpu_custom_call.1} parent=5 // pred_check_branch
        %2563 = sbr.rel (%p2561) target = $region36
      $region35: #{tpu_custom_call.1} parent=5 // pred_region
        %s2564 = ssub.s32 %s13, 2
        // Predicated region
        $region37: #{tpu_custom_call.1} parent=35 // pred_check
          %p2565 = pneg %p84
        $region38: #{tpu_custom_call.1} parent=35 // pred_check_branch
          %2567 = sbr.rel (%p2565) target = $region40
        $region39: #{tpu_custom_call.1} parent=35 // pred_region
          %s2568 = sand.u32 %s69, 1
          %s2569 = scalar_lea.sflag [#allocation4], %s2568
          %s2570 = sand.u32 %s69, 1
          %s2571 = smul.addr %s2570, 8
          %s2572 = scalar_lea.vmem [#allocation5], %s2571
          %2573 = dma.done %s2569, 128
        $region40: #{tpu_custom_call.1} parent=35 // pred_fallthru
          _
      $region36: #{tpu_custom_call.1} parent=5 // pred_fallthru
        _
    $region6: #{tpu_custom_call.1} parent=1 // loop_footer
      %s17 = sadd.s32 1, %s13
    $region7: #{tpu_custom_call.1} parent=1 // loop_footer_branch
      %12 = sbr.rel target = $region3
    $region8: #{tpu_custom_call.1} parent=1 // loop_exit
      _
    %2574 = vsyncpa [#allocation3], 1
    %s2575 = scalar_lea.sflag [#allocation3], 1
    %2576 = vsyncpa %s2575, 1
    %2577 = vsyncpa [#allocation4], 1
    %s2578 = scalar_lea.sflag [#allocation4], 1
    %2579 = vsyncpa %s2578, 1

</llo_original>
